<compile_context>
chip_gen: v7x
topology: tpu7x:2x2x1
jax: 0.10.0
libtpu: 0.0.40
codegen_flags: <defaults>
</compile_context>

<pallas_src>
import functools

import jax
import jax.numpy as jnp
from jax import lax
from jax.experimental import pallas as pl
from jax.experimental.pallas import tpu as pltpu

MXU_DTYPE = jnp.bfloat16          # MXU input dtype (accumulation stays f32)


def _round_up(a, b):
    return (a + b - 1) // b * b


def _vmem_limit_bytes():
    # ~70% of physical VMEM, capped at 64 MiB: 64 MiB on v5e/v6e (128 MiB
    # physical), ~45 MiB on v7x (64 MiB physical) -> double-buffer headroom.
    cap = 128 * 1024 * 1024
    try:
        v = int(pltpu.get_tpu_info().vmem_capacity_bytes)
        if v > 0:
            cap = v
    except Exception:
        pass
    return int(min(cap * 0.7, 64 * 1024 * 1024))


_VMEM_LIMIT = _vmem_limit_bytes()


# ----------------------------------------------------------------------------
# Kernel 1: fused (normx + qkv 1x1 conv + window attention), window gather and
#           head merge done in-kernel -> output written directly in NHWC.
# ----------------------------------------------------------------------------
def _win_attn_kernel(x_ref, wqkv_ref, bqkv_ref, bias_ref, o_ref, *,
                     C, num_heads, ws, cdt):
    Wp = x_ref.shape[2]
    nwin = Wp // ws
    T = ws * ws
    hd = C // num_heads

    x_row = x_ref[0]                      # (ws, Wp, C) bf16 (one row of windows)
    w = wqkv_ref[...]                     # (C, 3C) bf16 (normx + scale folded)
    b = bqkv_ref[...]                     # (1, 3C) f32
    bias = bias_ref[...]                  # (heads, T, T) f32

    outs_w = []
    for j in range(nwin):                 # static unroll over windows in the row
        xw = x_row[:, j * ws:(j + 1) * ws, :].reshape(T, C)
        qkv = jnp.dot(xw, w, preferred_element_type=jnp.float32) + b   # (T, 3C)
        outs_h = []
        for h in range(num_heads):        # static unroll over heads
            qh = qkv[:, h * hd:(h + 1) * hd].astype(cdt)
            kh = qkv[:, C + h * hd:C + (h + 1) * hd].astype(cdt)
            vh = qkv[:, 2 * C + h * hd:2 * C + (h + 1) * hd].astype(cdt)
            d = jnp.einsum('td,sd->ts', qh, kh,
                           preferred_element_type=jnp.float32) + bias[h]
            m = jnp.max(d, axis=-1, keepdims=True)
            p = jnp.exp(d - m)
            l = jnp.sum(p, axis=-1, keepdims=True)
            p = p * pl.reciprocal(l, approx=True)      # EUP-slot divide
            outs_h.append(jnp.dot(p.astype(cdt), vh,
                                  preferred_element_type=jnp.float32))  # (T, hd)
        # merge heads -> lane-dense (ws, ws, C) tile
        outs_w.append(jnp.concatenate(outs_h, axis=-1).reshape(ws, ws, C))
    o_ref[0] = jnp.concatenate(outs_w, axis=1).astype(o_ref.dtype)      # (ws,Wp,C)


def window_attention_qkv_fused(x_pad, wqkv, bqkv, bias, *, num_heads, window_size):
    """x_pad: (B, Hp, Wp, C) f32; wqkv: (C, 3C); bqkv: (3C,); bias: (h, T, T)."""
    B, Hp, Wp, C = x_pad.shape
    ws = window_size
    hh = Hp // ws
    T = ws * ws
    kernel = functools.partial(_win_attn_kernel, C=C, num_heads=num_heads,
                               ws=ws, cdt=MXU_DTYPE)
    return pl.pallas_call(
        kernel,
        out_shape=jax.ShapeDtypeStruct((B, Hp, Wp, C), jnp.float32),
        grid=(B, hh),
        in_specs=[
            pl.BlockSpec((1, ws, Wp, C), lambda b, i: (b, i, 0, 0)),
            pl.BlockSpec((C, 3 * C), lambda b, i: (0, 0)),
            pl.BlockSpec((1, 3 * C), lambda b, i: (0, 0)),
            pl.BlockSpec((num_heads, T, T), lambda b, i: (0, 0, 0)),
        ],
        out_specs=pl.BlockSpec((1, ws, Wp, C), lambda b, i: (b, i, 0, 0)),
        compiler_params=pltpu.CompilerParams(
            dimension_semantics=("parallel", "parallel"),
            vmem_limit_bytes=_VMEM_LIMIT),
    )(x_pad.astype(MXU_DTYPE),
      wqkv.astype(MXU_DTYPE),
      bqkv.reshape(1, 3 * C).astype(jnp.float32),
      bias.astype(jnp.float32))


# ----------------------------------------------------------------------------
# Kernel 2: fused local branch = 3x3 conv + 1x1 conv + BN (weights pre-folded),
#           in-VMEM im2col -> single wide-K MXU dot.
# ----------------------------------------------------------------------------
def _local_conv_kernel(x_ref, w_ref, b_ref, o_ref, *, H, W):
    Cs = x_ref.shape[-1]
    x = x_ref[0]                          # (H+2, W+2, Cs) bf16, zero padded
    cols = [x[kh:kh + H, kw:kw + W, :].reshape(H * W, Cs)
            for kh in range(3) for kw in range(3)]
    xcol = jnp.concatenate(cols, axis=-1)                 # (H*W, 9*Cs) im2col
    acc = jnp.dot(xcol, w_ref[...], preferred_element_type=jnp.float32)
    o_ref[0] = (acc + b_ref[...]).astype(o_ref.dtype)


def local_conv_fused(y_padded, w_folded, bias, H, W):
    """y_padded: (B, H+2, W+2, Cs) bf16; w_folded: (9*Cs, C) bf16; bias (1,C)."""
    B = y_padded.shape[0]
    Cs = y_padded.shape[-1]
    C = w_folded.shape[-1]
    kernel = functools.partial(_local_conv_kernel, H=H, W=W)
    # TODO(synk): row-tile (halo'd blocks) for large images so a full padded
    # image never has to fit in VMEM (matters on v7x's 64 MiB).
    return pl.pallas_call(
        kernel,
        out_shape=jax.ShapeDtypeStruct((B, H * W, C), jnp.float32),
        grid=(B,),
        in_specs=[
            pl.BlockSpec((1, H + 2, W + 2, Cs), lambda b: (b, 0, 0, 0)),
            pl.BlockSpec((9 * Cs, C), lambda b: (0, 0)),
            pl.BlockSpec((1, C), lambda b: (0, 0)),
        ],
        out_specs=pl.BlockSpec((1, H * W, C), lambda b: (b, 0, 0)),
        compiler_params=pltpu.CompilerParams(
            dimension_semantics=("parallel",),
            vmem_limit_bytes=_VMEM_LIMIT),
    )(y_padded, w_folded, bias)


# ----------------------------------------------------------------------------
# Kernel 3: fused SeparableConvBN = depthwise KxK + pointwise 1x1 + BN
# ----------------------------------------------------------------------------
def _sepconv_kernel(x_ref, dw_ref, pw_ref, b_ref, o_ref, *, K, Ho, Wo, cdt):
    x = x_ref[0]                          # (Hp, Wp, C) bf16, zero padded
    dw = dw_ref[...]                      # (K, K, C)   f32
    acc = jnp.zeros((Ho, Wo, x_ref.shape[-1]), jnp.float32)
    # TODO(synk): replace the shifted-window slices with pltpu.roll on a
    # lane-dense flattened layout + fori_loop(unroll=True) (XLU-slot shifts).
    for kh in range(K):
        for kw in range(K):
            acc = acc + x[kh:kh + Ho, kw:kw + Wo, :].astype(jnp.float32) * dw[kh, kw]
    res = jnp.dot(acc.reshape(Ho * Wo, acc.shape[-1]).astype(cdt), pw_ref[...],
                  preferred_element_type=jnp.float32)
    o_ref[0] = (res + b_ref[...]).astype(o_ref.dtype)


def sepconv_bn_fused(x_padded, dw_w, pw_folded, bias, K):
    """x_padded: (B, Hp, Wp, C) bf16; dw_w: (K,K,C) f32; pw_folded: (C,C) bf16."""
    B, Hp, Wp, C = x_padded.shape
    Ho, Wo = Hp - K + 1, Wp - K + 1
    kernel = functools.partial(_sepconv_kernel, K=K, Ho=Ho, Wo=Wo, cdt=MXU_DTYPE)
    out = pl.pallas_call(
        kernel,
        out_shape=jax.ShapeDtypeStruct((B, Ho * Wo, C), jnp.float32),
        grid=(B,),
        in_specs=[
            pl.BlockSpec((1, Hp, Wp, C), lambda b: (b, 0, 0, 0)),
            pl.BlockSpec((K, K, C), lambda b: (0, 0, 0)),
            pl.BlockSpec((C, C), lambda b: (0, 0)),
            pl.BlockSpec((1, C), lambda b: (0, 0)),
        ],
        out_specs=pl.BlockSpec((1, Ho * Wo, C), lambda b: (b, 0, 0)),
        compiler_params=pltpu.CompilerParams(
            dimension_semantics=("parallel",),
            vmem_limit_bytes=_VMEM_LIMIT),
    )(x_padded, dw_w, pw_folded, bias)
    return out.reshape(B, Ho, Wo, C)


# ----------------------------------------------------------------------------
# Kernel 4: fused MLP = (norm2-folded) fc1 + ReLU6 + fc2 + residual add.
#           Hidden activation stays resident in VMEM per M tile.
# ----------------------------------------------------------------------------
def _mlp_kernel(x_ref, w1_ref, b1_ref, w2_ref, b2_ref, o_ref, *, cdt):
    x = x_ref[...]                                            # (tm, C) f32
    h = jnp.dot(x.astype(cdt), w1_ref[...],
                preferred_element_type=jnp.float32) + b1_ref[...]
    h = jnp.clip(h, 0.0, 6.0)                                 # ReLU6
    y = jnp.dot(h.astype(cdt), w2_ref[...],
                preferred_element_type=jnp.float32) + b2_ref[...]
    o_ref[...] = (x + y).astype(o_ref.dtype)                  # fused residual


def mlp_residual_fused(x2d, w1, b1, w2, b2, *, bm=256):
    """x2d: (M, C) f32; w1: (C, hidden); w2: (hidden, C).  Returns x + MLP(x)."""
    M, C = x2d.shape
    hidden = w1.shape[1]
    tm = min(bm, _round_up(M, 8))
    Mp = _round_up(M, tm)
    xp = x2d if Mp == M else jnp.pad(x2d, ((0, Mp - M), (0, 0)))
    kernel = functools.partial(_mlp_kernel, cdt=MXU_DTYPE)
    out = pl.pallas_call(
        kernel,
        out_shape=jax.ShapeDtypeStruct((Mp, C), jnp.float32),
        grid=(Mp // tm,),
        in_specs=[
            pl.BlockSpec((tm, C), lambda i: (i, 0)),
            pl.BlockSpec((C, hidden), lambda i: (0, 0)),
            pl.BlockSpec((1, hidden), lambda i: (0, 0)),
            pl.BlockSpec((hidden, C), lambda i: (0, 0)),
            pl.BlockSpec((1, C), lambda i: (0, 0)),
        ],
        out_specs=pl.BlockSpec((tm, C), lambda i: (i, 0)),
        compiler_params=pltpu.CompilerParams(
            dimension_semantics=("parallel",),
            vmem_limit_bytes=_VMEM_LIMIT),
    )(xp, w1.astype(MXU_DTYPE), b1.reshape(1, hidden).astype(jnp.float32),
      w2.astype(MXU_DTYPE), b2.reshape(1, C).astype(jnp.float32))
    return out[:M] if Mp != M else out


# ----------------------------------------------------------------------------
# Plain-JAX glue helpers
# ----------------------------------------------------------------------------
def bn_affine(gamma, beta, mean, var, eps=1e-5):
    # BatchNorm2d in eval mode -> per-channel affine.
    scale = gamma / jnp.sqrt(var + eps)
    shift = beta - mean * scale
    return scale, shift


def make_relative_position_index(ws):
    coords = jnp.stack(jnp.meshgrid(jnp.arange(ws), jnp.arange(ws), indexing='ij'))
    cf = coords.reshape(2, -1)
    rel = cf[:, :, None] - cf[:, None, :]
    rel = jnp.transpose(rel, (1, 2, 0))
    rel = rel.at[:, :, 0].add(ws - 1)
    rel = rel.at[:, :, 1].add(ws - 1)
    rel = rel.at[:, :, 0].multiply(2 * ws - 1)
    return rel.sum(-1)  # (ws*ws, ws*ws) int32


# ----------------------------------------------------------------------------
# FusionTwo forward
# ----------------------------------------------------------------------------
def fusion_two_forward(p, x, y, *, num_heads, window_size):
    """x, y: NCHW float32.  Returns NCHW float32."""
    B, C, H, W = x.shape
    ws = window_size
    assert C % num_heads == 0
    hd = C // num_heads
    attn_scale = hd ** (-0.5)

    xh = jnp.transpose(x, (0, 2, 3, 1))  # NHWC residual stream (f32)
    yh = jnp.transpose(y, (0, 2, 3, 1))
    Cs = yh.shape[-1]

    # normy must be applied before the conv's zero padding (border stays 0)
    sy, ty = bn_affine(*p['normy'])
    yn = yh * sy + ty

    # ---------- fused local = local1(3x3 conv+BN) + local2(1x1 conv+BN) ------
    s1, t1 = bn_affine(*p['local1_bn'])
    s2, t2 = bn_affine(*p['local2_bn'])
    w1 = jnp.transpose(p['local1_w'], (2, 3, 1, 0)) * s1        # (3,3,Cs,C)
    w2 = p['local2_w'][:, :, 0, 0].T * s2                       # (Cs,C)
    w_local = w1.at[1, 1].add(w2)          # 1x1 branch folded into centre tap
    w_local = w_local.reshape(9 * Cs, C)   # row order matches in-kernel im2col
    b_local = (t1 + t2).reshape(1, C).astype(jnp.float32)
    yp = jnp.pad(yn, ((0, 0), (1, 1), (1, 1), (0, 0))).astype(MXU_DTYPE)
    local = local_conv_fused(yp, w_local.astype(MXU_DTYPE), b_local, H, W)
    local = local.reshape(B, H, W, C)

    # ---------- qkv 1x1 conv: normx + attention scale folded into weights -----
    sx, tx = bn_affine(*p['normx'])
    wqkv = p['qkv_w'][:, :, 0, 0].T                             # (C, 3C)
    wqkv_f = wqkv * sx[:, None]
    bqkv = tx @ wqkv
    wqkv_f = wqkv_f.at[:, :C].multiply(attn_scale)              # q * scale fold
    bqkv = bqkv.at[:C].multiply(attn_scale)

    # reflect-pad to window multiples (commutes with the per-channel affine)
    xpad = xh
    Hp, Wp = H, W
    if W % ws != 0:
        xpad = jnp.pad(xpad, ((0, 0), (0, 0), (0, ws - W % ws), (0, 0)),
                       mode='reflect')
        Wp = xpad.shape[2]
    if H % ws != 0:
        xpad = jnp.pad(xpad, ((0, 0), (0, ws - H % ws), (0, 0), (0, 0)),
                       mode='reflect')
        Hp = xpad.shape[1]

    T = ws * ws
    bias = p['rpb_table'][p['rp_index'].reshape(-1)].reshape(T, T, num_heads)
    bias = jnp.transpose(bias, (2, 0, 1))                       # (heads,T,T)

    # fused qkv + window attention; output already in NHWC (no departition pass)
    attn = window_attention_qkv_fused(xpad, wqkv_f, bqkv, bias,
                                      num_heads=num_heads, window_size=ws)
    attn = attn[:, :H, :W, :]

    # ---------- attn_x / attn_y: reflect pad + AvgPool (count_include_pad) ---
    pad_hw = ws // 2 - 1
    ax_in = jnp.pad(attn, ((0, 0), (0, 1), (0, 0), (0, 0)), mode='reflect')
    ax = lax.reduce_window(ax_in, 0.0, lax.add, (1, ws, 1, 1), (1, 1, 1, 1),
                           ((0, 0), (pad_hw, pad_hw), (0, 0), (0, 0))) / ws
    ay_in = jnp.pad(attn, ((0, 0), (0, 0), (0, 1), (0, 0)), mode='reflect')
    ay = lax.reduce_window(ay_in, 0.0, lax.add, (1, 1, ws, 1), (1, 1, 1, 1),
                           ((0, 0), (0, 0), (pad_hw, pad_hw), (0, 0))) / ws
    # TODO(synk): fuse the two 1-D avg pools + this add into a Pallas epilogue
    # to drop the extra HBM passes over the attention-sized tensor.
    out = ax + ay + local

    # ---------- pad_out + proj (SeparableConvBN, fused dw + pw + BN) ----------
    out = jnp.pad(out, ((0, 0), (0, 1), (0, 1), (0, 0)), mode='reflect')
    pad_dw = (ws - 1) // 2                 # PyTorch: (stride-1 + (k-1))//2 = 3
    out_p = jnp.pad(out, ((0, 0), (pad_dw, pad_dw), (pad_dw, pad_dw), (0, 0)))
    out_p = out_p.astype(MXU_DTYPE)        # halve the sepconv DMA
    dw_w = jnp.transpose(p['proj_dw_w'][:, 0, :, :], (1, 2, 0))   # (ws,ws,C)
    sp, tp = bn_affine(*p['proj_bn'])
    pw_f = (p['proj_pw_w'][:, :, 0, 0].T * sp).astype(MXU_DTYPE)  # (C,C)
    proj = sepconv_bn_fused(out_p, dw_w.astype(jnp.float32), pw_f,
                            tp.reshape(1, C).astype(jnp.float32), ws)
    assert proj.shape[1] >= H and proj.shape[2] >= W, proj.shape
    proj = proj[:, :H, :W, :]

    # residual 1 (drop_path = Identity since drop_path = 0.0)
    xh = xh + proj

    # ---------- MLP: norm2 folded into fc1; ReLU6; fc2; residual fused -------
    s3, t3 = bn_affine(*p['norm2'])
    wf1 = p['fc1_w'][:, :, 0, 0].T                      # (C, hidden)
    wf1_f = wf1 * s3[:, None]
    bf1 = p['fc1_b'] + t3 @ wf1
    wf2 = p['fc2_w'][:, :, 0, 0].T                      # (hidden, C)
    out2d = mlp_residual_fused(xh.reshape(B * H * W, C), wf1_f, bf1, wf2,
                               p['fc2_b'])
    xh = out2d.reshape(B, H, W, C)
    return jnp.transpose(xh, (0, 3, 1, 2))              # back to NCHW


# ----------------------------------------------------------------------------
# Deterministic synthetic parameters
# ----------------------------------------------------------------------------
def init_params(key, dim, ssmdims, num_heads, window_size, mlp_ratio):
    hidden = int(dim * mlp_ratio)
    ks = jax.random.split(key, 16)

    def norm_p(k, c):
        k1, k2, k3, k4 = jax.random.split(k, 4)
        gamma = 1.0 + 0.1 * jax.random.normal(k1, (c,))
        beta = 0.1 * jax.random.normal(k2, (c,))
        mean = 0.1 * jax.random.normal(k3, (c,))
        var = 1.0 + 0.1 * jnp.abs(jax.random.normal(k4, (c,)))
        return (gamma, beta, mean, var)

    def conv_w(k, shape):
        return 0.05 * jax.random.normal(k, shape)

    p = dict(
        normx=norm_p(ks[0], dim),
        normy=norm_p(ks[1], ssmdims),
        qkv_w=conv_w(ks[2], (3 * dim, dim, 1, 1)),
        local1_w=conv_w(ks[3], (dim, ssmdims, 3, 3)),
        local1_bn=norm_p(ks[4], dim),
        local2_w=conv_w(ks[5], (dim, ssmdims, 1, 1)),
        local2_bn=norm_p(ks[6], dim),
        proj_dw_w=conv_w(ks[7], (dim, 1, window_size, window_size)),
        proj_pw_w=conv_w(ks[8], (dim, dim, 1, 1)),
        proj_bn=norm_p(ks[9], dim),
        rpb_table=0.02 * jax.random.normal(
            ks[10], ((2 * window_size - 1) ** 2, num_heads)),
        rp_index=make_relative_position_index(window_size),
        fc1_w=conv_w(ks[11], (hidden, dim, 1, 1)),
        fc1_b=0.02 * jax.random.normal(ks[12], (hidden,)),
        fc2_w=conv_w(ks[13], (dim, hidden, 1, 1)),
        fc2_b=0.02 * jax.random.normal(ks[14], (dim,)),
        norm2=norm_p(ks[15], dim),
    )

    def cast(a):
        return a.astype(jnp.float32) if jnp.issubdtype(a.dtype, jnp.floating) else a

    return jax.tree_util.tree_map(cast, p)


if __name__ == "__main__":
    B, dim, ssmdims, H, W = 2, 32, 32, 16, 16
    num_heads, window_size, mlp_ratio = 4, 8, 4.0

    key = jax.random.PRNGKey(0)
    kx, ky, kp = jax.random.split(key, 3)
    x = jax.random.normal(kx, (B, dim, H, W), jnp.float32)
    y = jax.random.normal(ky, (B, ssmdims, H, W), jnp.float32)
    params = init_params(kp, dim, ssmdims, num_heads, window_size, mlp_ratio)

    out = fusion_two_forward(params, x, y,
                             num_heads=num_heads, window_size=window_size)
    out = jax.block_until_ready(out)
    assert out.shape == (B, dim, H, W), out.shape
    assert bool(jnp.all(jnp.isfinite(out)))
    print("KERNEL_OK")
</pallas_src>

<mosaic_0001>
module attributes {stable_mosaic.version = 11 : i64} {
  func.func @_local_conv_kernel(%arg0: i32, %arg1: memref<1x18x18x32xbf16, #tpu.memory_space<vmem>>, %arg2: memref<288x32xbf16, #tpu.memory_space<vmem>>, %arg3: memref<1x32xf32, #tpu.memory_space<vmem>>, %arg4: memref<1x256x32xf32, #tpu.memory_space<vmem>>) attributes {dimension_semantics = [#tpu.dimension_semantics<parallel>], iteration_bounds = array<i64: 2>, scalar_prefetch = 0 : i64, scratch_operands = 0 : i64, tpu.core_type = #tpu.core_type<tc>, window_params = [{transform_indices = @transform_0, window_bounds = array<i64: 1, 18, 18, 32>}, {pipeline_mode = #tpu.pipeline_mode<synchronous>, transform_indices = @transform_1, window_bounds = array<i64: 288, 32>}, {pipeline_mode = #tpu.pipeline_mode<synchronous>, transform_indices = @transform_2, window_bounds = array<i64: 1, 32>}, {transform_indices = @transform_3, window_bounds = array<i64: 1, 256, 32>}]} {
    %c0 = arith.constant 0 : index
    %c0_0 = arith.constant 0 : index
    %c0_1 = arith.constant 0 : index
    %c0_2 = arith.constant 0 : index
    %0 = vector.load %arg1[%c0, %c0_0, %c0_1, %c0_2] : memref<1x18x18x32xbf16, #tpu.memory_space<vmem>>, vector<1x18x18x32xbf16>
    %1 = vector.shape_cast %0 : vector<1x18x18x32xbf16> to vector<18x18x32xbf16>
    %2 = vector.extract_strided_slice %1 {offsets = [0, 0, 0], sizes = [16, 16, 32], strides = [1, 1, 1]} : vector<18x18x32xbf16> to vector<16x16x32xbf16>
    %3 = vector.shape_cast %2 : vector<16x16x32xbf16> to vector<256x32xbf16>
    %4 = vector.extract_strided_slice %1 {offsets = [0, 1, 0], sizes = [16, 16, 32], strides = [1, 1, 1]} : vector<18x18x32xbf16> to vector<16x16x32xbf16>
    %5 = vector.shape_cast %4 : vector<16x16x32xbf16> to vector<256x32xbf16>
    %6 = vector.extract_strided_slice %1 {offsets = [0, 2, 0], sizes = [16, 16, 32], strides = [1, 1, 1]} : vector<18x18x32xbf16> to vector<16x16x32xbf16>
    %7 = vector.shape_cast %6 : vector<16x16x32xbf16> to vector<256x32xbf16>
    %8 = vector.extract_strided_slice %1 {offsets = [1, 0, 0], sizes = [16, 16, 32], strides = [1, 1, 1]} : vector<18x18x32xbf16> to vector<16x16x32xbf16>
    %9 = vector.shape_cast %8 : vector<16x16x32xbf16> to vector<256x32xbf16>
    %10 = vector.extract_strided_slice %1 {offsets = [1, 1, 0], sizes = [16, 16, 32], strides = [1, 1, 1]} : vector<18x18x32xbf16> to vector<16x16x32xbf16>
    %11 = vector.shape_cast %10 : vector<16x16x32xbf16> to vector<256x32xbf16>
    %12 = vector.extract_strided_slice %1 {offsets = [1, 2, 0], sizes = [16, 16, 32], strides = [1, 1, 1]} : vector<18x18x32xbf16> to vector<16x16x32xbf16>
    %13 = vector.shape_cast %12 : vector<16x16x32xbf16> to vector<256x32xbf16>
    %14 = vector.extract_strided_slice %1 {offsets = [2, 0, 0], sizes = [16, 16, 32], strides = [1, 1, 1]} : vector<18x18x32xbf16> to vector<16x16x32xbf16>
    %15 = vector.shape_cast %14 : vector<16x16x32xbf16> to vector<256x32xbf16>
    %16 = vector.extract_strided_slice %1 {offsets = [2, 1, 0], sizes = [16, 16, 32], strides = [1, 1, 1]} : vector<18x18x32xbf16> to vector<16x16x32xbf16>
    %17 = vector.shape_cast %16 : vector<16x16x32xbf16> to vector<256x32xbf16>
    %18 = vector.extract_strided_slice %1 {offsets = [2, 2, 0], sizes = [16, 16, 32], strides = [1, 1, 1]} : vector<18x18x32xbf16> to vector<16x16x32xbf16>
    %19 = vector.shape_cast %18 : vector<16x16x32xbf16> to vector<256x32xbf16>
    %20 = tpu.concatenate %3, %5, %7, %9, %11, %13, %15, %17, %19 in 1 : vector<256x32xbf16>, vector<256x32xbf16>, vector<256x32xbf16>, vector<256x32xbf16>, vector<256x32xbf16>, vector<256x32xbf16>, vector<256x32xbf16>, vector<256x32xbf16>, vector<256x32xbf16> -> vector<256x288xbf16>
    %c0_3 = arith.constant 0 : index
    %c0_4 = arith.constant 0 : index
    %21 = vector.load %arg2[%c0_3, %c0_4] : memref<288x32xbf16, #tpu.memory_space<vmem>>, vector<288x32xbf16>
    %cst = arith.constant dense<0.000000e+00> : vector<256x32xf32>
    %22 = tpu.matmul %20, %21, %cst {dimension_numbers = #tpu.dot_dimension_numbers<[1], [0], [0], [1], [0, 0, 1, 1], [], []>} : vector<256x288xbf16>, vector<288x32xbf16>, vector<256x32xf32> -> vector<256x32xf32>
    %c0_5 = arith.constant 0 : index
    %c0_6 = arith.constant 0 : index
    %23 = vector.load %arg3[%c0_5, %c0_6] : memref<1x32xf32, #tpu.memory_space<vmem>>, vector<1x32xf32>
    %24 = vector.broadcast %23 : vector<1x32xf32> to vector<256x32xf32>
    %25 = arith.addf %22, %24 : vector<256x32xf32>
    %c0_7 = arith.constant 0 : index
    %c0_8 = arith.constant 0 : index
    %c0_9 = arith.constant 0 : index
    %26 = vector.load %arg4[%c0_7, %c0_8, %c0_9] : memref<1x256x32xf32, #tpu.memory_space<vmem>>, vector<1x256x32xf32>
    %27 = vector.shape_cast %26 : vector<1x256x32xf32> to vector<256x32xf32>
    %28 = vector.shape_cast %25 : vector<256x32xf32> to vector<1x256x32xf32>
    tpu.vector_store %arg4[%c0_7, %c0_8, %c0_9], %28 {strides = array<i32>} : memref<1x256x32xf32, #tpu.memory_space<vmem>>, vector<1x256x32xf32>,
    return
  }
  func.func @transform_0(%arg0: i32) -> (i32, i32, i32, i32) {
    %c0_i32 = arith.constant 0 : i32
    %c0_i32_0 = arith.constant 0 : i32
    %c0_i32_1 = arith.constant 0 : i32
    %c0_i32_2 = arith.constant 0 : i32
    return %arg0, %c0_i32, %c0_i32_0, %c0_i32_1 : i32, i32, i32, i32
  }
  func.func @transform_1(%arg0: i32) -> (i32, i32) {
    %c0_i32 = arith.constant 0 : i32
    %c0_i32_0 = arith.constant 0 : i32
    %c0_i32_1 = arith.constant 0 : i32
    return %c0_i32, %c0_i32_0 : i32, i32
  }
  func.func @transform_2(%arg0: i32) -> (i32, i32) {
    %c0_i32 = arith.constant 0 : i32
    %c0_i32_0 = arith.constant 0 : i32
    %c0_i32_1 = arith.constant 0 : i32
    return %c0_i32, %c0_i32_0 : i32, i32
  }
  func.func @transform_3(%arg0: i32) -> (i32, i32, i32) {
    %c0_i32 = arith.constant 0 : i32
    %c0_i32_0 = arith.constant 0 : i32
    %c0_i32_1 = arith.constant 0 : i32
    return %arg0, %c0_i32, %c0_i32_0 : i32, i32, i32
  }
}

</mosaic_0001>

<llo_original>
// kernel: tpu_custom_call.1
$region0: #{tpu_custom_call.1}
  #allocation0 [shape = 'u32[]', space=smem, size = 0x4, offset = 0x4, fixed_abs, tag = 'smem constant byte address 0x4 - core index']
  #allocation1 [shape = 'u32[144,128]{1,0:T(1,128)}', space=vmem, size = 0x12000, scoped, tag = 'internal scratch']
  %s0 = inlined_call_operand.hbm [shape: bf16[2,18,18,32], index: 0, kind: input, shape index: {}]
  %s1 = inlined_call_operand.hbm [shape: bf16[288,32], index: 1, kind: input, shape index: {}]
  %s2 = inlined_call_operand.hbm [shape: f32[1,32], index: 2, kind: input, shape index: {}]
  %s3 = inlined_call_operand.hbm [shape: f32[2,256,32], index: 3, kind: output, shape index: {}]
  %s4 = sld [smem:[#allocation0]]
  $region57: #{tpu_custom_call.1} parent=0
    _
  %s6 = ssub.s32 1, %s4
  %s7 = scalar_select 0, %s6, %s4
  $region1: #{tpu_custom_call.1} parent=0
    #allocation2 [shape = 'u8[221184]{0}', space=vmem, size = 0x36000, scoped, tag = 'input window, operand 0']
    #allocation3 [shape = 's32[2]{0}', space=sflag, size = 0x8, scoped, tag = 'scoped memory for tpu_custom_call.1']
    #allocation4 [shape = 's32[2]{0}', space=sflag, size = 0x8, scoped, tag = 'scoped memory for tpu_custom_call.1']
    #allocation5 [shape = 'u8[73728]{0}', space=vmem, size = 0x12000, scoped, tag = 'input window, operand 1, single buffered']
    #allocation6 [shape = 's32[1]{0}', space=sflag, size = 0x4, scoped, tag = 'scoped memory for tpu_custom_call.1']
    #allocation7 [shape = 'u8[512]{0}', space=vmem, size = 0x400, scoped, tag = 'input window, operand 2, single buffered']
    #allocation8 [shape = 'u8[262144]{0}', space=vmem, size = 0x40000, scoped, tag = 'output window, operand 0']
    %8 = vsyncpa [#allocation3], 0
    %s9 = scalar_lea.sflag [#allocation3], 1
    %10 = vsyncpa %s9, 0
    %11 = vsyncpa [#allocation6], 0
    %12 = vsyncpa [#allocation4], 0
    %s13 = scalar_lea.sflag [#allocation4], 1
    %14 = vsyncpa %s13, 0
    loop: start=0, step=1, limit=4
    $region2: #{tpu_custom_call.1} parent=1 // loop_pre_header
      _
    $region3: #{tpu_custom_call.1} parent=1 // loop_header
      %s16 = sphi 0, %s20
      %p17 = scmp.ge.s32.totalorder %s16, 4
      %s26 = sphi 0, %s28
      %s29 = sphi 0, %s26
      %s30 = sphi 0, %s29
      %s46 = sphi 0, %s30
      %s50 = sphi 0, %s50
      %s52 = sphi 0, %s50
      %s53 = sphi 0, %s52
      %s67 = sphi 0, %s53
      %s71 = sphi 0, %s71
      %s73 = sphi 0, %s71
      %s74 = sphi 0, %s73
      %s88 = sphi 0, %s74
      %s94 = sphi 0, %s96
      %s97 = sphi 0, %s94
      %s98 = sphi 0, %s97
      %s114 = sphi 0, %s98
    $region4: #{tpu_custom_call.1} parent=1 // loop_header_branch
      %19 = sbr.rel (%p17) target = $region8
    $region5: #{tpu_custom_call.1} parent=1 // loop_body
      %s21 = ssub.s32 %s16, 1
      %s22 = ssub.s32 %s16, 2
      %s23 = sadd.s32 %s16, 1
      %s24 = ssub.s32 %s16, %s23
      %p25 = scmp.eq.s32.totalorder %s24, 0
      %s27 = sadd.s32 %s26, 1
      %s28 = scalar_select %p25, %s26, %s27
      %p31 = pneg %p25
      %p32 = scmp.eq.s32.totalorder %s16, 1
      %p33 = por %p31, %p32
      %p34 = scmp.ne.s32.totalorder %s26, %s29
      %p35 = scmp.eq.s32.totalorder %s16, 0
      %p36 = por %p34, %p35
      %p37 = scmp.ne.s32.totalorder %s26, %s29
      %p38 = scmp.eq.s32.totalorder %s21, 1
      %p39 = por %p37, %p38
      %p40 = scmp.ne.s32.totalorder %s29, %s30
      %p41 = scmp.eq.s32.totalorder %s21, 0
      %p42 = por %p40, %p41
      %p43 = scmp.ne.s32.totalorder %s29, %s30
      %p44 = scmp.eq.s32.totalorder %s22, 1
      %p45 = por %p43, %p44
      %p47 = scmp.ne.s32.totalorder %s30, %s46
      %p48 = scmp.eq.s32.totalorder %s22, 0
      %p49 = por %p47, %p48
      %s51 = sadd.s32 %s50, 1
      %p54 = scmp.eq.s32.totalorder %s16, 1
      %p55 = scmp.ne.s32.totalorder %s50, %s52
      %p56 = scmp.eq.s32.totalorder %s16, 0
      %p57 = por %p55, %p56
      %p58 = scmp.ne.s32.totalorder %s50, %s52
      %p59 = scmp.eq.s32.totalorder %s21, 1
      %p60 = por %p58, %p59
      %p61 = scmp.ne.s32.totalorder %s52, %s53
      %p62 = scmp.eq.s32.totalorder %s21, 0
      %p63 = por %p61, %p62
      %p64 = scmp.ne.s32.totalorder %s52, %s53
      %p65 = scmp.eq.s32.totalorder %s22, 1
      %p66 = por %p64, %p65
      %p68 = scmp.ne.s32.totalorder %s53, %s67
      %p69 = scmp.eq.s32.totalorder %s22, 0
      %p70 = por %p68, %p69
      %s72 = sadd.s32 %s71, 1
      %p75 = scmp.eq.s32.totalorder %s16, 1
      %p76 = scmp.ne.s32.totalorder %s71, %s73
      %p77 = scmp.eq.s32.totalorder %s16, 0
      %p78 = por %p76, %p77
      %p79 = scmp.ne.s32.totalorder %s71, %s73
      %p80 = scmp.eq.s32.totalorder %s21, 1
      %p81 = por %p79, %p80
      %p82 = scmp.ne.s32.totalorder %s73, %s74
      %p83 = scmp.eq.s32.totalorder %s21, 0
      %p84 = por %p82, %p83
      %p85 = scmp.ne.s32.totalorder %s73, %s74
      %p86 = scmp.eq.s32.totalorder %s22, 1
      %p87 = por %p85, %p86
      %p89 = scmp.ne.s32.totalorder %s74, %s88
      %p90 = scmp.eq.s32.totalorder %s22, 0
      %p91 = por %p89, %p90
      %s92 = ssub.s32 %s16, %s23
      %p93 = scmp.eq.s32.totalorder %s92, 0
      %s95 = sadd.s32 %s94, 1
      %s96 = scalar_select %p93, %s94, %s95
      %p99 = pneg %p93
      %p100 = scmp.eq.s32.totalorder %s16, 1
      %p101 = por %p99, %p100
      %p102 = scmp.ne.s32.totalorder %s94, %s97
      %p103 = scmp.eq.s32.totalorder %s16, 0
      %p104 = por %p102, %p103
      %p105 = scmp.ne.s32.totalorder %s94, %s97
      %p106 = scmp.eq.s32.totalorder %s21, 1
      %p107 = por %p105, %p106
      %p108 = scmp.ne.s32.totalorder %s97, %s98
      %p109 = scmp.eq.s32.totalorder %s21, 0
      %p110 = por %p108, %p109
      %p111 = scmp.ne.s32.totalorder %s97, %s98
      %p112 = scmp.eq.s32.totalorder %s22, 1
      %p113 = por %p111, %p112
      %p115 = scmp.ne.s32.totalorder %s98, %s114
      %p116 = scmp.eq.s32.totalorder %s22, 0
      %p117 = por %p115, %p116
      %p118 = scmp.le.s32.totalorder 1, %s16
      %p119 = scmp.lt.s32.totalorder %s16, 3
      %p120 = pnand %p118, %p119
      %p121 = pneg %p120
      // Predicated region
      $region9: #{tpu_custom_call.1} parent=5 // pred_check
        _
      $region10: #{tpu_custom_call.1} parent=5 // pred_check_branch
        %123 = sbr.rel (%p120) target = $region12
      $region11: #{tpu_custom_call.1} parent=5 // pred_region
        %s124 = ssub.s32 %s16, 1
        // Predicated region
        $region13: #{tpu_custom_call.1} parent=11 // pred_check
          %p125 = pneg %p63
        $region14: #{tpu_custom_call.1} parent=11 // pred_check_branch
          %127 = sbr.rel (%p125) target = $region16
        $region15: #{tpu_custom_call.1} parent=11 // pred_region
          %s129 = ssub.s32 2304, 2304
          %130 = vsyncadd [#allocation6], %s129
          %s131 = sshll.u32 [#allocation5], 4
          %s132 = int_to_ptr.vmem [resolvable:$true] %s131
          %137 = dma.hbm_to_vmem [thread:$0]  %s1, 2304, %s132, [#allocation6], 64, 64, 4
        $region16: #{tpu_custom_call.1} parent=11 // pred_fallthru
          _
        // Predicated region
        $region17: #{tpu_custom_call.1} parent=11 // pred_check
          %p138 = pneg %p84
        $region18: #{tpu_custom_call.1} parent=11 // pred_check_branch
          %140 = sbr.rel (%p138) target = $region20
        $region19: #{tpu_custom_call.1} parent=11 // pred_region
          %s142 = ssub.s32 16, 16
          %143 = vsyncadd [#allocation6], %s142
          %s145 = sshll.u32 [#allocation7], 4
          %s146 = int_to_ptr.vmem [resolvable:$true] %s145
          %148 = dma.hbm_to_vmem [thread:$0]  %s2, 16, %s146, [#allocation6]
        $region20: #{tpu_custom_call.1} parent=11 // pred_fallthru
          _
      $region12: #{tpu_custom_call.1} parent=5 // pred_fallthru
        _
      %p149 = scmp.lt.s32.totalorder %s16, 2
      // Predicated region
      $region21: #{tpu_custom_call.1} parent=5 // pred_check
        %p150 = pneg %p149
      $region22: #{tpu_custom_call.1} parent=5 // pred_check_branch
        %152 = sbr.rel (%p150) target = $region24
      $region23: #{tpu_custom_call.1} parent=5 // pred_region
        // Predicated region
        $region25: #{tpu_custom_call.1} parent=23 // pred_check
          %p153 = pneg %p36
        $region26: #{tpu_custom_call.1} parent=23 // pred_check_branch
          %155 = sbr.rel (%p153) target = $region28
        $region27: #{tpu_custom_call.1} parent=23 // pred_region
          %s156 = sand.u32 %s26, 1
          %s157 = scalar_lea.sflag [#allocation3], %s156
          %s158 = sand.u32 %s26, 1
          %s159 = smul.addr %s158, 216
          %s160 = scalar_lea.vmem [#allocation2], %s159
          %s162 = ssub.s32 3456, 3456
          %163 = vsyncadd %s157, %s162
          %s164 = smul.addr %s16, 54
          %s165 = smul.addr %s164, 64
          %s166 = scalar_lea.hbm %s0, %s165
          %s167 = sshll.u32 %s160, 4
          %s168 = int_to_ptr.vmem [resolvable:$true] %s167
          %173 = dma.hbm_to_vmem [thread:$0]  %s166, 3456, %s168, %s157, 64, 64, 4
        $region28: #{tpu_custom_call.1} parent=23 // pred_fallthru
          _
      $region24: #{tpu_custom_call.1} parent=5 // pred_fallthru
        _
      %p174 = scmp.le.s32.totalorder 1, %s16
      %p175 = scmp.lt.s32.totalorder %s16, 3
      %p176 = pnand %p174, %p175
      %p177 = pneg %p176
      // Predicated region
      $region29: #{tpu_custom_call.1} parent=5 // pred_check
        _
      $region30: #{tpu_custom_call.1} parent=5 // pred_check_branch
        %179 = sbr.rel (%p176) target = $region32
      $region31: #{tpu_custom_call.1} parent=5 // pred_region
        %s180 = ssub.s32 %s16, 1
        %s181 = sand.u32 %s29, 1
        %s182 = scalar_lea.sflag [#allocation3], %s181
        %s183 = sand.u32 %s29, 1
        %s184 = smul.addr %s183, 216
        %s185 = scalar_lea.vmem [#allocation2], %s184
        // Predicated region
        $region33: #{tpu_custom_call.1} parent=31 // pred_check
          %p186 = pneg %p42
        $region34: #{tpu_custom_call.1} parent=31 // pred_check_branch
          %188 = sbr.rel (%p186) target = $region36
        $region35: #{tpu_custom_call.1} parent=31 // pred_region
          %189 = dma.done %s182, 3456
        $region36: #{tpu_custom_call.1} parent=31 // pred_fallthru
          _
        // Predicated region
        $region37: #{tpu_custom_call.1} parent=31 // pred_check
          %p190 = pneg %p63
        $region38: #{tpu_custom_call.1} parent=31 // pred_check_branch
          %192 = sbr.rel (%p190) target = $region40
        $region39: #{tpu_custom_call.1} parent=31 // pred_region
          %193 = dma.done [#allocation6], 2304
        $region40: #{tpu_custom_call.1} parent=31 // pred_fallthru
          _
        // Predicated region
        $region41: #{tpu_custom_call.1} parent=31 // pred_check
          %p194 = pneg %p84
        $region42: #{tpu_custom_call.1} parent=31 // pred_check_branch
          %196 = sbr.rel (%p194) target = $region44
        $region43: #{tpu_custom_call.1} parent=31 // pred_region
          %197 = dma.done [#allocation6], 16
        $region44: #{tpu_custom_call.1} parent=31 // pred_fallthru
          _
        %s198 = sand.u32 %s29, 1
        %s199 = scalar_lea.sflag [#allocation3], %s198
        %s200 = sand.u32 %s29, 1
        %s201 = smul.addr %s200, 216
        %s202 = scalar_lea.vmem [#allocation2], %s201
        %p203 = pneg %p42
        %p204 = pneg %p39
        %p205 = pneg %p63
        %p206 = pneg %p60
        %p207 = pneg %p84
        %p208 = pneg %p81
        %p209 = pneg %p110
        %p210 = pneg %p107
        %s211 = sand.u32 %s97, 1
        %s212 = scalar_lea.sflag [#allocation4], %s211
        %s213 = sand.u32 %s97, 1
        %s214 = smul.addr %s213, 256
        %s215 = scalar_lea.vmem [#allocation8], %s214
        %v217 = vld [vmem:[%s185] sm:$0xf]
        %v218 = vld [vmem:[%s185 + $0x4] sm:$0xf]
        %v219 = vld [vmem:[%s185 + $0x8] sm:$0x1]
        %v220 = vld [vmem:[%s185 + $0xc] sm:$0xf]
        %v221 = vld [vmem:[%s185 + $0x10] sm:$0xf]
        %v222 = vld [vmem:[%s185 + $0x14] sm:$0x1]
        %v223 = vld [vmem:[%s185 + $0x18] sm:$0xf]
        %v224 = vld [vmem:[%s185 + $0x1c] sm:$0xf]
        %v225 = vld [vmem:[%s185 + $0x20] sm:$0x1]
        %v226 = vld [vmem:[%s185 + $0x24] sm:$0xf]
        %v227 = vld [vmem:[%s185 + $0x28] sm:$0xf]
        %v228 = vld [vmem:[%s185 + $0x2c] sm:$0x1]
        %v229 = vld [vmem:[%s185 + $0x30] sm:$0xf]
        %v230 = vld [vmem:[%s185 + $0x34] sm:$0xf]
        %v231 = vld [vmem:[%s185 + $0x38] sm:$0x1]
        %v232 = vld [vmem:[%s185 + $0x3c] sm:$0xf]
        %v233 = vld [vmem:[%s185 + $0x40] sm:$0xf]
        %v234 = vld [vmem:[%s185 + $0x44] sm:$0x1]
        %v235 = vld [vmem:[%s185 + $0x48] sm:$0xf]
        %v236 = vld [vmem:[%s185 + $0x4c] sm:$0xf]
        %v237 = vld [vmem:[%s185 + $0x50] sm:$0x1]
        %v238 = vld [vmem:[%s185 + $0x54] sm:$0xf]
        %v239 = vld [vmem:[%s185 + $0x58] sm:$0xf]
        %v240 = vld [vmem:[%s185 + $0x5c] sm:$0x1]
        %v241 = vld [vmem:[%s185 + $0x60] sm:$0xf]
        %v242 = vld [vmem:[%s185 + $0x64] sm:$0xf]
        %v243 = vld [vmem:[%s185 + $0x68] sm:$0x1]
        %v244 = vld [vmem:[%s185 + $0x6c] sm:$0xf]
        %v245 = vld [vmem:[%s185 + $0x70] sm:$0xf]
        %v246 = vld [vmem:[%s185 + $0x74] sm:$0x1]
        %v247 = vld [vmem:[%s185 + $0x78] sm:$0xf]
        %v248 = vld [vmem:[%s185 + $0x7c] sm:$0xf]
        %v249 = vld [vmem:[%s185 + $0x80] sm:$0x1]
        %v250 = vld [vmem:[%s185 + $0x84] sm:$0xf]
        %v251 = vld [vmem:[%s185 + $0x88] sm:$0xf]
        %v252 = vld [vmem:[%s185 + $0x8c] sm:$0x1]
        %v253 = vld [vmem:[%s185 + $0x90] sm:$0xf]
        %v254 = vld [vmem:[%s185 + $0x94] sm:$0xf]
        %v255 = vld [vmem:[%s185 + $0x98] sm:$0x1]
        %v256 = vld [vmem:[%s185 + $0x9c] sm:$0xf]
        %v257 = vld [vmem:[%s185 + $0xa0] sm:$0xf]
        %v258 = vld [vmem:[%s185 + $0xa4] sm:$0x1]
        %v259 = vld [vmem:[%s185 + $0xa8] sm:$0xf]
        %v260 = vld [vmem:[%s185 + $0xac] sm:$0xf]
        %v261 = vld [vmem:[%s185 + $0xb0] sm:$0x1]
        %v262 = vld [vmem:[%s185 + $0xb4] sm:$0xf]
        %v263 = vld [vmem:[%s185 + $0xb8] sm:$0xf]
        %v264 = vld [vmem:[%s185 + $0xbc] sm:$0x1]
        %v265 = vld [vmem:[%s185 + $0xc0] sm:$0xf]
        %v266 = vld [vmem:[%s185 + $0xc4] sm:$0xf]
        %v267 = vld [vmem:[%s185 + $0xc8] sm:$0x1]
        %v268 = vld [vmem:[%s185 + $0xcc] sm:$0xf]
        %v269 = vld [vmem:[%s185 + $0xd0] sm:$0xf]
        %v270 = vld [vmem:[%s185 + $0xd4] sm:$0x1]
        %vm271 = vsmask.f32 3328
        %vm272 = vsmask.f32 7440
        %vm273 = vmor %vm271, %vm272
        %v275 = vshrl.u32 %v217, 16
        %v277 = vrot.slane %v275, 4
        %v278 = vshll.u32 %v217, 16
        %v280 = vrot.slane %v278, 5
        %v281 = vor.u32 %v277, %v280
        %v282 = vrot.slane %v281, 4
        %v284 = vshll.u32 %v218, 16
        %v286 = vrot.slane %v284, 5
        %v287 = vsel %vm273, %v282, %v286
        %v288 = vshrl.u32 %v218, 16
        %v290 = vrot.slane %v288, 4
        %v291 = vor.u32 %v290, %v286
        %v292 = vrot.slane %v291, 4
        %v294 = vshll.u32 %v219, 16
        %v296 = vrot.slane %v294, 5
        %v297 = vsel %vm273, %v292, %v296
        %v299 = vshrl.u32 %v220, 16
        %v301 = vrot.slane %v299, 4
        %v302 = vshll.u32 %v220, 16
        %v304 = vrot.slane %v302, 5
        %v305 = vor.u32 %v301, %v304
        %v306 = vrot.slane %v305, 4
        %v308 = vshll.u32 %v221, 16
        %v310 = vrot.slane %v308, 5
        %v311 = vsel %vm273, %v306, %v310
        %v312 = vshrl.u32 %v221, 16
        %v314 = vrot.slane %v312, 4
        %v315 = vor.u32 %v314, %v310
        %v316 = vrot.slane %v315, 4
        %v318 = vshll.u32 %v222, 16
        %v320 = vrot.slane %v318, 5
        %v321 = vsel %vm273, %v316, %v320
        %v323 = vshrl.u32 %v223, 16
        %v325 = vrot.slane %v323, 4
        %v326 = vshll.u32 %v223, 16
        %v328 = vrot.slane %v326, 5
        %v329 = vor.u32 %v325, %v328
        %v330 = vrot.slane %v329, 4
        %v332 = vshll.u32 %v224, 16
        %v334 = vrot.slane %v332, 5
        %v335 = vsel %vm273, %v330, %v334
        %v336 = vshrl.u32 %v224, 16
        %v338 = vrot.slane %v336, 4
        %v339 = vor.u32 %v338, %v334
        %v340 = vrot.slane %v339, 4
        %v342 = vshll.u32 %v225, 16
        %v344 = vrot.slane %v342, 5
        %v345 = vsel %vm273, %v340, %v344
        %v347 = vshrl.u32 %v226, 16
        %v349 = vrot.slane %v347, 4
        %v350 = vshll.u32 %v226, 16
        %v352 = vrot.slane %v350, 5
        %v353 = vor.u32 %v349, %v352
        %v354 = vrot.slane %v353, 4
        %v356 = vshll.u32 %v227, 16
        %v358 = vrot.slane %v356, 5
        %v359 = vsel %vm273, %v354, %v358
        %v360 = vshrl.u32 %v227, 16
        %v362 = vrot.slane %v360, 4
        %v363 = vor.u32 %v362, %v358
        %v364 = vrot.slane %v363, 4
        %v366 = vshll.u32 %v228, 16
        %v368 = vrot.slane %v366, 5
        %v369 = vsel %vm273, %v364, %v368
        %v371 = vshrl.u32 %v229, 16
        %v373 = vrot.slane %v371, 4
        %v374 = vshll.u32 %v229, 16
        %v376 = vrot.slane %v374, 5
        %v377 = vor.u32 %v373, %v376
        %v378 = vrot.slane %v377, 4
        %v380 = vshll.u32 %v230, 16
        %v382 = vrot.slane %v380, 5
        %v383 = vsel %vm273, %v378, %v382
        %v384 = vshrl.u32 %v230, 16
        %v386 = vrot.slane %v384, 4
        %v387 = vor.u32 %v386, %v382
        %v388 = vrot.slane %v387, 4
        %v390 = vshll.u32 %v231, 16
        %v392 = vrot.slane %v390, 5
        %v393 = vsel %vm273, %v388, %v392
        %v395 = vshrl.u32 %v232, 16
        %v397 = vrot.slane %v395, 4
        %v398 = vshll.u32 %v232, 16
        %v400 = vrot.slane %v398, 5
        %v401 = vor.u32 %v397, %v400
        %v402 = vrot.slane %v401, 4
        %v404 = vshll.u32 %v233, 16
        %v406 = vrot.slane %v404, 5
        %v407 = vsel %vm273, %v402, %v406
        %v408 = vshrl.u32 %v233, 16
        %v410 = vrot.slane %v408, 4
        %v411 = vor.u32 %v410, %v406
        %v412 = vrot.slane %v411, 4
        %v414 = vshll.u32 %v234, 16
        %v416 = vrot.slane %v414, 5
        %v417 = vsel %vm273, %v412, %v416
        %v419 = vshrl.u32 %v235, 16
        %v421 = vrot.slane %v419, 4
        %v422 = vshll.u32 %v235, 16
        %v424 = vrot.slane %v422, 5
        %v425 = vor.u32 %v421, %v424
        %v426 = vrot.slane %v425, 4
        %v428 = vshll.u32 %v236, 16
        %v430 = vrot.slane %v428, 5
        %v431 = vsel %vm273, %v426, %v430
        %v432 = vshrl.u32 %v236, 16
        %v434 = vrot.slane %v432, 4
        %v435 = vor.u32 %v434, %v430
        %v436 = vrot.slane %v435, 4
        %v438 = vshll.u32 %v237, 16
        %v440 = vrot.slane %v438, 5
        %v441 = vsel %vm273, %v436, %v440
        %v443 = vshrl.u32 %v238, 16
        %v445 = vrot.slane %v443, 4
        %v446 = vshll.u32 %v238, 16
        %v448 = vrot.slane %v446, 5
        %v449 = vor.u32 %v445, %v448
        %v450 = vrot.slane %v449, 4
        %v452 = vshll.u32 %v239, 16
        %v454 = vrot.slane %v452, 5
        %v455 = vsel %vm273, %v450, %v454
        %v456 = vshrl.u32 %v239, 16
        %v458 = vrot.slane %v456, 4
        %v459 = vor.u32 %v458, %v454
        %v460 = vrot.slane %v459, 4
        %v462 = vshll.u32 %v240, 16
        %v464 = vrot.slane %v462, 5
        %v465 = vsel %vm273, %v460, %v464
        %v467 = vshrl.u32 %v241, 16
        %v469 = vrot.slane %v467, 4
        %v470 = vshll.u32 %v241, 16
        %v472 = vrot.slane %v470, 5
        %v473 = vor.u32 %v469, %v472
        %v474 = vrot.slane %v473, 4
        %v476 = vshll.u32 %v242, 16
        %v478 = vrot.slane %v476, 5
        %v479 = vsel %vm273, %v474, %v478
        %v480 = vshrl.u32 %v242, 16
        %v482 = vrot.slane %v480, 4
        %v483 = vor.u32 %v482, %v478
        %v484 = vrot.slane %v483, 4
        %v486 = vshll.u32 %v243, 16
        %v488 = vrot.slane %v486, 5
        %v489 = vsel %vm273, %v484, %v488
        %v491 = vshrl.u32 %v244, 16
        %v493 = vrot.slane %v491, 4
        %v494 = vshll.u32 %v244, 16
        %v496 = vrot.slane %v494, 5
        %v497 = vor.u32 %v493, %v496
        %v498 = vrot.slane %v497, 4
        %v500 = vshll.u32 %v245, 16
        %v502 = vrot.slane %v500, 5
        %v503 = vsel %vm273, %v498, %v502
        %v504 = vshrl.u32 %v245, 16
        %v506 = vrot.slane %v504, 4
        %v507 = vor.u32 %v506, %v502
        %v508 = vrot.slane %v507, 4
        %v510 = vshll.u32 %v246, 16
        %v512 = vrot.slane %v510, 5
        %v513 = vsel %vm273, %v508, %v512
        %v515 = vshrl.u32 %v247, 16
        %v517 = vrot.slane %v515, 4
        %v518 = vshll.u32 %v247, 16
        %v520 = vrot.slane %v518, 5
        %v521 = vor.u32 %v517, %v520
        %v522 = vrot.slane %v521, 4
        %v524 = vshll.u32 %v248, 16
        %v526 = vrot.slane %v524, 5
        %v527 = vsel %vm273, %v522, %v526
        %v528 = vshrl.u32 %v248, 16
        %v530 = vrot.slane %v528, 4
        %v531 = vor.u32 %v530, %v526
        %v532 = vrot.slane %v531, 4
        %v534 = vshll.u32 %v249, 16
        %v536 = vrot.slane %v534, 5
        %v537 = vsel %vm273, %v532, %v536
        %v539 = vshrl.u32 %v250, 16
        %v541 = vrot.slane %v539, 4
        %v542 = vshll.u32 %v250, 16
        %v544 = vrot.slane %v542, 5
        %v545 = vor.u32 %v541, %v544
        %v546 = vrot.slane %v545, 4
        %v548 = vshll.u32 %v251, 16
        %v550 = vrot.slane %v548, 5
        %v551 = vsel %vm273, %v546, %v550
        %v552 = vshrl.u32 %v251, 16
        %v554 = vrot.slane %v552, 4
        %v555 = vor.u32 %v554, %v550
        %v556 = vrot.slane %v555, 4
        %v558 = vshll.u32 %v252, 16
        %v560 = vrot.slane %v558, 5
        %v561 = vsel %vm273, %v556, %v560
        %v563 = vshrl.u32 %v253, 16
        %v565 = vrot.slane %v563, 4
        %v566 = vshll.u32 %v253, 16
        %v568 = vrot.slane %v566, 5
        %v569 = vor.u32 %v565, %v568
        %v570 = vrot.slane %v569, 4
        %v572 = vshll.u32 %v254, 16
        %v574 = vrot.slane %v572, 5
        %v575 = vsel %vm273, %v570, %v574
        %v576 = vshrl.u32 %v254, 16
        %v578 = vrot.slane %v576, 4
        %v579 = vor.u32 %v578, %v574
        %v580 = vrot.slane %v579, 4
        %v582 = vshll.u32 %v255, 16
        %v584 = vrot.slane %v582, 5
        %v585 = vsel %vm273, %v580, %v584
        %v587 = vshrl.u32 %v256, 16
        %v589 = vrot.slane %v587, 4
        %v590 = vshll.u32 %v256, 16
        %v592 = vrot.slane %v590, 5
        %v593 = vor.u32 %v589, %v592
        %v594 = vrot.slane %v593, 4
        %v596 = vshll.u32 %v257, 16
        %v598 = vrot.slane %v596, 5
        %v599 = vsel %vm273, %v594, %v598
        %v600 = vshrl.u32 %v257, 16
        %v602 = vrot.slane %v600, 4
        %v603 = vor.u32 %v602, %v598
        %v604 = vrot.slane %v603, 4
        %v606 = vshll.u32 %v258, 16
        %v608 = vrot.slane %v606, 5
        %v609 = vsel %vm273, %v604, %v608
        %v611 = vshrl.u32 %v259, 16
        %v613 = vrot.slane %v611, 4
        %v614 = vshll.u32 %v259, 16
        %v616 = vrot.slane %v614, 5
        %v617 = vor.u32 %v613, %v616
        %v618 = vrot.slane %v617, 4
        %v620 = vshll.u32 %v260, 16
        %v622 = vrot.slane %v620, 5
        %v623 = vsel %vm273, %v618, %v622
        %v624 = vshrl.u32 %v260, 16
        %v626 = vrot.slane %v624, 4
        %v627 = vor.u32 %v626, %v622
        %v628 = vrot.slane %v627, 4
        %v630 = vshll.u32 %v261, 16
        %v632 = vrot.slane %v630, 5
        %v633 = vsel %vm273, %v628, %v632
        %v635 = vshrl.u32 %v262, 16
        %v637 = vrot.slane %v635, 4
        %v638 = vshll.u32 %v262, 16
        %v640 = vrot.slane %v638, 5
        %v641 = vor.u32 %v637, %v640
        %v642 = vrot.slane %v641, 4
        %v644 = vshll.u32 %v263, 16
        %v646 = vrot.slane %v644, 5
        %v647 = vsel %vm273, %v642, %v646
        %v648 = vshrl.u32 %v263, 16
        %v650 = vrot.slane %v648, 4
        %v651 = vor.u32 %v650, %v646
        %v652 = vrot.slane %v651, 4
        %v654 = vshll.u32 %v264, 16
        %v656 = vrot.slane %v654, 5
        %v657 = vsel %vm273, %v652, %v656
        %vm706 = vcmask 1042432
        %vm707 = vcmask 1046532
        %vm708 = vmor %vm706, %vm707
        %v709 = vrot.slane %v217, 5
        %v710 = vrot.slane %v709, 4
        %v711 = vrot.slane %v218, 5
        %v712 = vsel %vm708, %v710, %v711
        %v713 = vrot.slane %v711, 4
        %v714 = vrot.slane %v219, 5
        %v715 = vsel %vm708, %v713, %v714
        %v716 = vrot.slane %v220, 5
        %v717 = vrot.slane %v716, 4
        %v718 = vrot.slane %v221, 5
        %v719 = vsel %vm708, %v717, %v718
        %v720 = vrot.slane %v718, 4
        %v721 = vrot.slane %v222, 5
        %v722 = vsel %vm708, %v720, %v721
        %v723 = vrot.slane %v223, 5
        %v724 = vrot.slane %v723, 4
        %v725 = vrot.slane %v224, 5
        %v726 = vsel %vm708, %v724, %v725
        %v727 = vrot.slane %v725, 4
        %v728 = vrot.slane %v225, 5
        %v729 = vsel %vm708, %v727, %v728
        %v730 = vrot.slane %v226, 5
        %v731 = vrot.slane %v730, 4
        %v732 = vrot.slane %v227, 5
        %v733 = vsel %vm708, %v731, %v732
        %v734 = vrot.slane %v732, 4
        %v735 = vrot.slane %v228, 5
        %v736 = vsel %vm708, %v734, %v735
        %v737 = vrot.slane %v229, 5
        %v738 = vrot.slane %v737, 4
        %v739 = vrot.slane %v230, 5
        %v740 = vsel %vm708, %v738, %v739
        %v741 = vrot.slane %v739, 4
        %v742 = vrot.slane %v231, 5
        %v743 = vsel %vm708, %v741, %v742
        %v744 = vrot.slane %v232, 5
        %v745 = vrot.slane %v744, 4
        %v746 = vrot.slane %v233, 5
        %v747 = vsel %vm708, %v745, %v746
        %v748 = vrot.slane %v746, 4
        %v749 = vrot.slane %v234, 5
        %v750 = vsel %vm708, %v748, %v749
        %v751 = vrot.slane %v235, 5
        %v752 = vrot.slane %v751, 4
        %v753 = vrot.slane %v236, 5
        %v754 = vsel %vm708, %v752, %v753
        %v755 = vrot.slane %v753, 4
        %v756 = vrot.slane %v237, 5
        %v757 = vsel %vm708, %v755, %v756
        %v758 = vrot.slane %v238, 5
        %v759 = vrot.slane %v758, 4
        %v760 = vrot.slane %v239, 5
        %v761 = vsel %vm708, %v759, %v760
        %v762 = vrot.slane %v760, 4
        %v763 = vrot.slane %v240, 5
        %v764 = vsel %vm708, %v762, %v763
        %v765 = vrot.slane %v241, 5
        %v766 = vrot.slane %v765, 4
        %v767 = vrot.slane %v242, 5
        %v768 = vsel %vm708, %v766, %v767
        %v769 = vrot.slane %v767, 4
        %v770 = vrot.slane %v243, 5
        %v771 = vsel %vm708, %v769, %v770
        %v772 = vrot.slane %v244, 5
        %v773 = vrot.slane %v772, 4
        %v774 = vrot.slane %v245, 5
        %v775 = vsel %vm708, %v773, %v774
        %v776 = vrot.slane %v774, 4
        %v777 = vrot.slane %v246, 5
        %v778 = vsel %vm708, %v776, %v777
        %v779 = vrot.slane %v247, 5
        %v780 = vrot.slane %v779, 4
        %v781 = vrot.slane %v248, 5
        %v782 = vsel %vm708, %v780, %v781
        %v783 = vrot.slane %v781, 4
        %v784 = vrot.slane %v249, 5
        %v785 = vsel %vm708, %v783, %v784
        %v786 = vrot.slane %v250, 5
        %v787 = vrot.slane %v786, 4
        %v788 = vrot.slane %v251, 5
        %v789 = vsel %vm708, %v787, %v788
        %v790 = vrot.slane %v788, 4
        %v791 = vrot.slane %v252, 5
        %v792 = vsel %vm708, %v790, %v791
        %v793 = vrot.slane %v253, 5
        %v794 = vrot.slane %v793, 4
        %v795 = vrot.slane %v254, 5
        %v796 = vsel %vm708, %v794, %v795
        %v797 = vrot.slane %v795, 4
        %v798 = vrot.slane %v255, 5
        %v799 = vsel %vm708, %v797, %v798
        %v800 = vrot.slane %v256, 5
        %v801 = vrot.slane %v800, 4
        %v802 = vrot.slane %v257, 5
        %v803 = vsel %vm708, %v801, %v802
        %v804 = vrot.slane %v802, 4
        %v805 = vrot.slane %v258, 5
        %v806 = vsel %vm708, %v804, %v805
        %v807 = vrot.slane %v259, 5
        %v808 = vrot.slane %v807, 4
        %v809 = vrot.slane %v260, 5
        %v810 = vsel %vm708, %v808, %v809
        %v811 = vrot.slane %v809, 4
        %v812 = vrot.slane %v261, 5
        %v813 = vsel %vm708, %v811, %v812
        %v814 = vrot.slane %v262, 5
        %v815 = vrot.slane %v814, 4
        %v816 = vrot.slane %v263, 5
        %v817 = vsel %vm708, %v815, %v816
        %v818 = vrot.slane %v816, 4
        %v819 = vrot.slane %v264, 5
        %v820 = vsel %vm708, %v818, %v819
        %v822 = vshrl.u32 %v265, 16
        %v824 = vrot.slane %v822, 4
        %v825 = vshll.u32 %v265, 16
        %v827 = vrot.slane %v825, 5
        %v828 = vor.u32 %v824, %v827
        %v829 = vrot.slane %v828, 4
        %v831 = vshll.u32 %v266, 16
        %v833 = vrot.slane %v831, 5
        %v834 = vsel %vm273, %v829, %v833
        %v835 = vshrl.u32 %v266, 16
        %v837 = vrot.slane %v835, 4
        %v838 = vor.u32 %v837, %v833
        %v839 = vrot.slane %v838, 4
        %v841 = vshll.u32 %v267, 16
        %v843 = vrot.slane %v841, 5
        %v844 = vsel %vm273, %v839, %v843
        %v848 = vrot.slane %v265, 5
        %v849 = vrot.slane %v848, 4
        %v850 = vrot.slane %v266, 5
        %v851 = vsel %vm708, %v849, %v850
        %v852 = vrot.slane %v850, 4
        %v853 = vrot.slane %v267, 5
        %v854 = vsel %vm708, %v852, %v853
        %v856 = vshrl.u32 %v268, 16
        %v858 = vrot.slane %v856, 4
        %v859 = vshll.u32 %v268, 16
        %v861 = vrot.slane %v859, 5
        %v862 = vor.u32 %v858, %v861
        %v863 = vrot.slane %v862, 4
        %v865 = vshll.u32 %v269, 16
        %v867 = vrot.slane %v865, 5
        %v868 = vsel %vm273, %v863, %v867
        %v869 = vshrl.u32 %v269, 16
        %v871 = vrot.slane %v869, 4
        %v872 = vor.u32 %v871, %v867
        %v873 = vrot.slane %v872, 4
        %v875 = vshll.u32 %v270, 16
        %v877 = vrot.slane %v875, 5
        %v878 = vsel %vm273, %v873, %v877
        %v882 = vrot.slane %v268, 5
        %v883 = vrot.slane %v882, 4
        %v884 = vrot.slane %v269, 5
        %v885 = vsel %vm708, %v883, %v884
        %v886 = vrot.slane %v884, 4
        %v887 = vrot.slane %v270, 5
        %v888 = vsel %vm708, %v886, %v887
        %v889 = vunpack.c.l.b16 %v217
        %v890 = vunpack.c.l.b16 %v218
        %v891 = vunpack.c.l.b16 %v220
        %v892 = vunpack.c.l.b16 %v221
        %v893 = vunpack.c.l.b16 %v223
        %v894 = vunpack.c.l.b16 %v224
        %v895 = vunpack.c.l.b16 %v226
        %v896 = vunpack.c.l.b16 %v227
        %v897 = vunpack.c.l.b16 %v229
        %v898 = vunpack.c.l.b16 %v230
        %v899 = vunpack.c.l.b16 %v232
        %v900 = vunpack.c.l.b16 %v233
        %v901 = vunpack.c.l.b16 %v235
        %v902 = vunpack.c.l.b16 %v236
        %v903 = vunpack.c.l.b16 %v238
        %v904 = vunpack.c.l.b16 %v239
        %v905 = vunpack.c.l.b16 %v241
        %v906 = vunpack.c.l.b16 %v242
        %v907 = vunpack.c.l.b16 %v244
        %v908 = vunpack.c.l.b16 %v245
        %v909 = vunpack.c.l.b16 %v247
        %v910 = vunpack.c.l.b16 %v248
        %v911 = vunpack.c.l.b16 %v250
        %v912 = vunpack.c.l.b16 %v251
        %v913 = vunpack.c.l.b16 %v253
        %v914 = vunpack.c.l.b16 %v254
        %v915 = vunpack.c.l.b16 %v256
        %v916 = vunpack.c.l.b16 %v257
        %v917 = vunpack.c.l.b16 %v259
        %v918 = vunpack.c.l.b16 %v260
        %v919 = vunpack.c.l.b16 %v262
        %v920 = vunpack.c.l.b16 %v263
        %v921 = vpack.c.b16 %v890, %v889
        %v922 = vpack.c.b16 %v892, %v891
        %v923 = vpack.c.b16 %v894, %v893
        %v924 = vpack.c.b16 %v896, %v895
        %v925 = vpack.c.b16 %v898, %v897
        %v926 = vpack.c.b16 %v900, %v899
        %v927 = vpack.c.b16 %v902, %v901
        %v928 = vpack.c.b16 %v904, %v903
        %v929 = vpack.c.b16 %v906, %v905
        %v930 = vpack.c.b16 %v908, %v907
        %v931 = vpack.c.b16 %v910, %v909
        %v932 = vpack.c.b16 %v912, %v911
        %v933 = vpack.c.b16 %v914, %v913
        %v934 = vpack.c.b16 %v916, %v915
        %v935 = vpack.c.b16 %v918, %v917
        %v936 = vpack.c.b16 %v920, %v919
        %v937 = vunpack.c.l.b16 %v287
        %v938 = vunpack.c.l.b16 %v297
        %v939 = vunpack.c.l.b16 %v311
        %v940 = vunpack.c.l.b16 %v321
        %v941 = vunpack.c.l.b16 %v335
        %v942 = vunpack.c.l.b16 %v345
        %v943 = vunpack.c.l.b16 %v359
        %v944 = vunpack.c.l.b16 %v369
        %v945 = vunpack.c.l.b16 %v383
        %v946 = vunpack.c.l.b16 %v393
        %v947 = vunpack.c.l.b16 %v407
        %v948 = vunpack.c.l.b16 %v417
        %v949 = vunpack.c.l.b16 %v431
        %v950 = vunpack.c.l.b16 %v441
        %v951 = vunpack.c.l.b16 %v455
        %v952 = vunpack.c.l.b16 %v465
        %v953 = vunpack.c.l.b16 %v479
        %v954 = vunpack.c.l.b16 %v489
        %v955 = vunpack.c.l.b16 %v503
        %v956 = vunpack.c.l.b16 %v513
        %v957 = vunpack.c.l.b16 %v527
        %v958 = vunpack.c.l.b16 %v537
        %v959 = vunpack.c.l.b16 %v551
        %v960 = vunpack.c.l.b16 %v561
        %v961 = vunpack.c.l.b16 %v575
        %v962 = vunpack.c.l.b16 %v585
        %v963 = vunpack.c.l.b16 %v599
        %v964 = vunpack.c.l.b16 %v609
        %v965 = vunpack.c.l.b16 %v623
        %v966 = vunpack.c.l.b16 %v633
        %v967 = vunpack.c.l.b16 %v647
        %v968 = vunpack.c.l.b16 %v657
        %v969 = vpack.c.b16 %v938, %v937
        %v970 = vpack.c.b16 %v940, %v939
        %v971 = vpack.c.b16 %v942, %v941
        %v972 = vpack.c.b16 %v944, %v943
        %v973 = vpack.c.b16 %v946, %v945
        %v974 = vpack.c.b16 %v948, %v947
        %v975 = vpack.c.b16 %v950, %v949
        %v976 = vpack.c.b16 %v952, %v951
        %v977 = vpack.c.b16 %v954, %v953
        %v978 = vpack.c.b16 %v956, %v955
        %v979 = vpack.c.b16 %v958, %v957
        %v980 = vpack.c.b16 %v960, %v959
        %v981 = vpack.c.b16 %v962, %v961
        %v982 = vpack.c.b16 %v964, %v963
        %v983 = vpack.c.b16 %v966, %v965
        %v984 = vpack.c.b16 %v968, %v967
        %985 = vrot.lane.b32.xlu0 %v969, 32
        %v986 = vpop.permute.xlu0 %985
        %987 = vrot.lane.b32.xlu0 %v970, 32
        %v988 = vpop.permute.xlu0 %987
        %989 = vrot.lane.b32.xlu0 %v971, 32
        %v990 = vpop.permute.xlu0 %989
        %991 = vrot.lane.b32.xlu0 %v972, 32
        %v992 = vpop.permute.xlu0 %991
        %993 = vrot.lane.b32.xlu0 %v973, 32
        %v994 = vpop.permute.xlu0 %993
        %995 = vrot.lane.b32.xlu0 %v974, 32
        %v996 = vpop.permute.xlu0 %995
        %997 = vrot.lane.b32.xlu0 %v975, 32
        %v998 = vpop.permute.xlu0 %997
        %999 = vrot.lane.b32.xlu0 %v976, 32
        %v1000 = vpop.permute.xlu0 %999
        %1001 = vrot.lane.b32.xlu0 %v977, 32
        %v1002 = vpop.permute.xlu0 %1001
        %1003 = vrot.lane.b32.xlu0 %v978, 32
        %v1004 = vpop.permute.xlu0 %1003
        %1005 = vrot.lane.b32.xlu0 %v979, 32
        %v1006 = vpop.permute.xlu0 %1005
        %1007 = vrot.lane.b32.xlu0 %v980, 32
        %v1008 = vpop.permute.xlu0 %1007
        %1009 = vrot.lane.b32.xlu0 %v981, 32
        %v1010 = vpop.permute.xlu0 %1009
        %1011 = vrot.lane.b32.xlu0 %v982, 32
        %v1012 = vpop.permute.xlu0 %1011
        %1013 = vrot.lane.b32.xlu0 %v983, 32
        %v1014 = vpop.permute.xlu0 %1013
        %1015 = vrot.lane.b32.xlu0 %v984, 32
        %v1016 = vpop.permute.xlu0 %1015
        %v1017 = vunpack.c.l.b16 %v712
        %v1018 = vunpack.c.l.b16 %v715
        %v1019 = vunpack.c.l.b16 %v719
        %v1020 = vunpack.c.l.b16 %v722
        %v1021 = vunpack.c.l.b16 %v726
        %v1022 = vunpack.c.l.b16 %v729
        %v1023 = vunpack.c.l.b16 %v733
        %v1024 = vunpack.c.l.b16 %v736
        %v1025 = vunpack.c.l.b16 %v740
        %v1026 = vunpack.c.l.b16 %v743
        %v1027 = vunpack.c.l.b16 %v747
        %v1028 = vunpack.c.l.b16 %v750
        %v1029 = vunpack.c.l.b16 %v754
        %v1030 = vunpack.c.l.b16 %v757
        %v1031 = vunpack.c.l.b16 %v761
        %v1032 = vunpack.c.l.b16 %v764
        %v1033 = vunpack.c.l.b16 %v768
        %v1034 = vunpack.c.l.b16 %v771
        %v1035 = vunpack.c.l.b16 %v775
        %v1036 = vunpack.c.l.b16 %v778
        %v1037 = vunpack.c.l.b16 %v782
        %v1038 = vunpack.c.l.b16 %v785
        %v1039 = vunpack.c.l.b16 %v789
        %v1040 = vunpack.c.l.b16 %v792
        %v1041 = vunpack.c.l.b16 %v796
        %v1042 = vunpack.c.l.b16 %v799
        %v1043 = vunpack.c.l.b16 %v803
        %v1044 = vunpack.c.l.b16 %v806
        %v1045 = vunpack.c.l.b16 %v810
        %v1046 = vunpack.c.l.b16 %v813
        %v1047 = vunpack.c.l.b16 %v817
        %v1048 = vunpack.c.l.b16 %v820
        %v1049 = vpack.c.b16 %v1018, %v1017
        %v1050 = vpack.c.b16 %v1020, %v1019
        %v1051 = vpack.c.b16 %v1022, %v1021
        %v1052 = vpack.c.b16 %v1024, %v1023
        %v1053 = vpack.c.b16 %v1026, %v1025
        %v1054 = vpack.c.b16 %v1028, %v1027
        %v1055 = vpack.c.b16 %v1030, %v1029
        %v1056 = vpack.c.b16 %v1032, %v1031
        %v1057 = vpack.c.b16 %v1034, %v1033
        %v1058 = vpack.c.b16 %v1036, %v1035
        %v1059 = vpack.c.b16 %v1038, %v1037
        %v1060 = vpack.c.b16 %v1040, %v1039
        %v1061 = vpack.c.b16 %v1042, %v1041
        %v1062 = vpack.c.b16 %v1044, %v1043
        %v1063 = vpack.c.b16 %v1046, %v1045
        %v1064 = vpack.c.b16 %v1048, %v1047
        %1065 = vrot.lane.b32.xlu0 %v1049, 64
        %v1066 = vpop.permute.xlu0 %1065
        %1067 = vrot.lane.b32.xlu0 %v1050, 64
        %v1068 = vpop.permute.xlu0 %1067
        %1069 = vrot.lane.b32.xlu0 %v1051, 64
        %v1070 = vpop.permute.xlu0 %1069
        %1071 = vrot.lane.b32.xlu0 %v1052, 64
        %v1072 = vpop.permute.xlu0 %1071
        %1073 = vrot.lane.b32.xlu0 %v1053, 64
        %v1074 = vpop.permute.xlu0 %1073
        %1075 = vrot.lane.b32.xlu0 %v1054, 64
        %v1076 = vpop.permute.xlu0 %1075
        %1077 = vrot.lane.b32.xlu0 %v1055, 64
        %v1078 = vpop.permute.xlu0 %1077
        %1079 = vrot.lane.b32.xlu0 %v1056, 64
        %v1080 = vpop.permute.xlu0 %1079
        %1081 = vrot.lane.b32.xlu0 %v1057, 64
        %v1082 = vpop.permute.xlu0 %1081
        %1083 = vrot.lane.b32.xlu0 %v1058, 64
        %v1084 = vpop.permute.xlu0 %1083
        %1085 = vrot.lane.b32.xlu0 %v1059, 64
        %v1086 = vpop.permute.xlu0 %1085
        %1087 = vrot.lane.b32.xlu0 %v1060, 64
        %v1088 = vpop.permute.xlu0 %1087
        %1089 = vrot.lane.b32.xlu0 %v1061, 64
        %v1090 = vpop.permute.xlu0 %1089
        %1091 = vrot.lane.b32.xlu0 %v1062, 64
        %v1092 = vpop.permute.xlu0 %1091
        %1093 = vrot.lane.b32.xlu0 %v1063, 64
        %v1094 = vpop.permute.xlu0 %1093
        %1095 = vrot.lane.b32.xlu0 %v1064, 64
        %v1096 = vpop.permute.xlu0 %1095
        %v1097 = vunpack.c.l.b16 %v265
        %v1098 = vunpack.c.l.b16 %v266
        %v1099 = vpack.c.b16 %v1098, %v1097
        %1100 = vrot.lane.b32.xlu0 %v922, 96
        %v1101 = vpop.permute.xlu0 %1100
        %1102 = vrot.lane.b32.xlu0 %v923, 96
        %v1103 = vpop.permute.xlu0 %1102
        %1104 = vrot.lane.b32.xlu0 %v924, 96
        %v1105 = vpop.permute.xlu0 %1104
        %1106 = vrot.lane.b32.xlu0 %v925, 96
        %v1107 = vpop.permute.xlu0 %1106
        %1108 = vrot.lane.b32.xlu0 %v926, 96
        %v1109 = vpop.permute.xlu0 %1108
        %1110 = vrot.lane.b32.xlu0 %v927, 96
        %v1111 = vpop.permute.xlu0 %1110
        %1112 = vrot.lane.b32.xlu0 %v928, 96
        %v1113 = vpop.permute.xlu0 %1112
        %1114 = vrot.lane.b32.xlu0 %v929, 96
        %v1115 = vpop.permute.xlu0 %1114
        %1116 = vrot.lane.b32.xlu0 %v930, 96
        %v1117 = vpop.permute.xlu0 %1116
        %1118 = vrot.lane.b32.xlu0 %v931, 96
        %v1119 = vpop.permute.xlu0 %1118
        %1120 = vrot.lane.b32.xlu0 %v932, 96
        %v1121 = vpop.permute.xlu0 %1120
        %1122 = vrot.lane.b32.xlu0 %v933, 96
        %v1123 = vpop.permute.xlu0 %1122
        %1124 = vrot.lane.b32.xlu0 %v934, 96
        %v1125 = vpop.permute.xlu0 %1124
        %1126 = vrot.lane.b32.xlu0 %v935, 96
        %v1127 = vpop.permute.xlu0 %1126
        %1128 = vrot.lane.b32.xlu0 %v936, 96
        %v1129 = vpop.permute.xlu0 %1128
        %1130 = vrot.lane.b32.xlu0 %v1099, 96
        %v1131 = vpop.permute.xlu0 %1130
        %v1132 = vunpack.c.l.b16 %v834
        %v1133 = vunpack.c.l.b16 %v844
        %v1134 = vpack.c.b16 %v1133, %v1132
        %v1135 = vunpack.c.l.b16 %v851
        %v1136 = vunpack.c.l.b16 %v854
        %v1137 = vpack.c.b16 %v1136, %v1135
        %1138 = vrot.lane.b32.xlu0 %v1050, 32
        %v1139 = vpop.permute.xlu0 %1138
        %1140 = vrot.lane.b32.xlu0 %v1051, 32
        %v1141 = vpop.permute.xlu0 %1140
        %1142 = vrot.lane.b32.xlu0 %v1052, 32
        %v1143 = vpop.permute.xlu0 %1142
        %1144 = vrot.lane.b32.xlu0 %v1053, 32
        %v1145 = vpop.permute.xlu0 %1144
        %1146 = vrot.lane.b32.xlu0 %v1054, 32
        %v1147 = vpop.permute.xlu0 %1146
        %1148 = vrot.lane.b32.xlu0 %v1055, 32
        %v1149 = vpop.permute.xlu0 %1148
        %1150 = vrot.lane.b32.xlu0 %v1056, 32
        %v1151 = vpop.permute.xlu0 %1150
        %1152 = vrot.lane.b32.xlu0 %v1057, 32
        %v1153 = vpop.permute.xlu0 %1152
        %1154 = vrot.lane.b32.xlu0 %v1058, 32
        %v1155 = vpop.permute.xlu0 %1154
        %1156 = vrot.lane.b32.xlu0 %v1059, 32
        %v1157 = vpop.permute.xlu0 %1156
        %1158 = vrot.lane.b32.xlu0 %v1060, 32
        %v1159 = vpop.permute.xlu0 %1158
        %1160 = vrot.lane.b32.xlu0 %v1061, 32
        %v1161 = vpop.permute.xlu0 %1160
        %1162 = vrot.lane.b32.xlu0 %v1062, 32
        %v1163 = vpop.permute.xlu0 %1162
        %1164 = vrot.lane.b32.xlu0 %v1063, 32
        %v1165 = vpop.permute.xlu0 %1164
        %1166 = vrot.lane.b32.xlu0 %v1064, 32
        %v1167 = vpop.permute.xlu0 %1166
        %1168 = vrot.lane.b32.xlu0 %v1137, 32
        %v1169 = vpop.permute.xlu0 %1168
        %v1170 = vunpack.c.l.b16 %v268
        %v1171 = vunpack.c.l.b16 %v269
        %v1172 = vpack.c.b16 %v1171, %v1170
        %1173 = vrot.lane.b32.xlu0 %v923, 64
        %v1174 = vpop.permute.xlu0 %1173
        %1175 = vrot.lane.b32.xlu0 %v924, 64
        %v1176 = vpop.permute.xlu0 %1175
        %1177 = vrot.lane.b32.xlu0 %v925, 64
        %v1178 = vpop.permute.xlu0 %1177
        %1179 = vrot.lane.b32.xlu0 %v926, 64
        %v1180 = vpop.permute.xlu0 %1179
        %1181 = vrot.lane.b32.xlu0 %v927, 64
        %v1182 = vpop.permute.xlu0 %1181
        %1183 = vrot.lane.b32.xlu0 %v928, 64
        %v1184 = vpop.permute.xlu0 %1183
        %1185 = vrot.lane.b32.xlu0 %v929, 64
        %v1186 = vpop.permute.xlu0 %1185
        %1187 = vrot.lane.b32.xlu0 %v930, 64
        %v1188 = vpop.permute.xlu0 %1187
        %1189 = vrot.lane.b32.xlu0 %v931, 64
        %v1190 = vpop.permute.xlu0 %1189
        %1191 = vrot.lane.b32.xlu0 %v932, 64
        %v1192 = vpop.permute.xlu0 %1191
        %1193 = vrot.lane.b32.xlu0 %v933, 64
        %v1194 = vpop.permute.xlu0 %1193
        %1195 = vrot.lane.b32.xlu0 %v934, 64
        %v1196 = vpop.permute.xlu0 %1195
        %1197 = vrot.lane.b32.xlu0 %v935, 64
        %v1198 = vpop.permute.xlu0 %1197
        %1199 = vrot.lane.b32.xlu0 %v936, 64
        %v1200 = vpop.permute.xlu0 %1199
        %1201 = vrot.lane.b32.xlu0 %v1099, 64
        %v1202 = vpop.permute.xlu0 %1201
        %1203 = vrot.lane.b32.xlu0 %v1172, 64
        %v1204 = vpop.permute.xlu0 %1203
        %v1205 = vunpack.c.l.b16 %v868
        %v1206 = vunpack.c.l.b16 %v878
        %v1207 = vpack.c.b16 %v1206, %v1205
        %1208 = vrot.lane.b32.xlu0 %v971, 96
        %v1209 = vpop.permute.xlu0 %1208
        %1210 = vrot.lane.b32.xlu0 %v972, 96
        %v1211 = vpop.permute.xlu0 %1210
        %1212 = vrot.lane.b32.xlu0 %v973, 96
        %v1213 = vpop.permute.xlu0 %1212
        %1214 = vrot.lane.b32.xlu0 %v974, 96
        %v1215 = vpop.permute.xlu0 %1214
        %1216 = vrot.lane.b32.xlu0 %v975, 96
        %v1217 = vpop.permute.xlu0 %1216
        %1218 = vrot.lane.b32.xlu0 %v976, 96
        %v1219 = vpop.permute.xlu0 %1218
        %1220 = vrot.lane.b32.xlu0 %v977, 96
        %v1221 = vpop.permute.xlu0 %1220
        %1222 = vrot.lane.b32.xlu0 %v978, 96
        %v1223 = vpop.permute.xlu0 %1222
        %1224 = vrot.lane.b32.xlu0 %v979, 96
        %v1225 = vpop.permute.xlu0 %1224
        %1226 = vrot.lane.b32.xlu0 %v980, 96
        %v1227 = vpop.permute.xlu0 %1226
        %1228 = vrot.lane.b32.xlu0 %v981, 96
        %v1229 = vpop.permute.xlu0 %1228
        %1230 = vrot.lane.b32.xlu0 %v982, 96
        %v1231 = vpop.permute.xlu0 %1230
        %1232 = vrot.lane.b32.xlu0 %v983, 96
        %v1233 = vpop.permute.xlu0 %1232
        %1234 = vrot.lane.b32.xlu0 %v984, 96
        %v1235 = vpop.permute.xlu0 %1234
        %1236 = vrot.lane.b32.xlu0 %v1134, 96
        %v1237 = vpop.permute.xlu0 %1236
        %1238 = vrot.lane.b32.xlu0 %v1207, 96
        %v1239 = vpop.permute.xlu0 %1238
        %v1240 = vunpack.c.l.b16 %v885
        %v1241 = vunpack.c.l.b16 %v888
        %v1242 = vpack.c.b16 %v1241, %v1240
        %vm1243 = vcmask 261120
        %v1246 = vsel %vm1243, %v921, %v986
        %v1249 = vsel %vm1243, %v922, %v988
        %v1252 = vsel %vm1243, %v923, %v990
        %v1255 = vsel %vm1243, %v924, %v992
        %v1258 = vsel %vm1243, %v925, %v994
        %v1261 = vsel %vm1243, %v926, %v996
        %v1264 = vsel %vm1243, %v927, %v998
        %v1267 = vsel %vm1243, %v928, %v1000
        %v1270 = vsel %vm1243, %v929, %v1002
        %v1273 = vsel %vm1243, %v930, %v1004
        %v1276 = vsel %vm1243, %v931, %v1006
        %v1279 = vsel %vm1243, %v932, %v1008
        %v1282 = vsel %vm1243, %v933, %v1010
        %v1285 = vsel %vm1243, %v934, %v1012
        %v1288 = vsel %vm1243, %v935, %v1014
        %v1291 = vsel %vm1243, %v936, %v1016
        %vm1292 = vcmask 523264
        %v1294 = vsel %vm1292, %v1246, %v1066
        %v1296 = vsel %vm1292, %v1249, %v1068
        %v1298 = vsel %vm1292, %v1252, %v1070
        %v1300 = vsel %vm1292, %v1255, %v1072
        %v1302 = vsel %vm1292, %v1258, %v1074
        %v1304 = vsel %vm1292, %v1261, %v1076
        %v1306 = vsel %vm1292, %v1264, %v1078
        %v1308 = vsel %vm1292, %v1267, %v1080
        %v1310 = vsel %vm1292, %v1270, %v1082
        %v1312 = vsel %vm1292, %v1273, %v1084
        %v1314 = vsel %vm1292, %v1276, %v1086
        %v1316 = vsel %vm1292, %v1279, %v1088
        %v1318 = vsel %vm1292, %v1282, %v1090
        %v1320 = vsel %vm1292, %v1285, %v1092
        %v1322 = vsel %vm1292, %v1288, %v1094
        %v1324 = vsel %vm1292, %v1291, %v1096
        %vm1325 = vcmask 785408
        %v1327 = vsel %vm1325, %v1294, %v1101
        %v1330 = vsel %vm1325, %v1296, %v1103
        %v1333 = vsel %vm1325, %v1298, %v1105
        %v1336 = vsel %vm1325, %v1300, %v1107
        %v1339 = vsel %vm1325, %v1302, %v1109
        %v1342 = vsel %vm1325, %v1304, %v1111
        %v1345 = vsel %vm1325, %v1306, %v1113
        %v1348 = vsel %vm1325, %v1308, %v1115
        %v1351 = vsel %vm1325, %v1310, %v1117
        %v1354 = vsel %vm1325, %v1312, %v1119
        %v1357 = vsel %vm1325, %v1314, %v1121
        %v1360 = vsel %vm1325, %v1316, %v1123
        %v1363 = vsel %vm1325, %v1318, %v1125
        %v1366 = vsel %vm1325, %v1320, %v1127
        %v1369 = vsel %vm1325, %v1322, %v1129
        %v1372 = vsel %vm1325, %v1324, %v1131
        %v1376 = vsel %vm1243, %v970, %v1139
        %v1379 = vsel %vm1243, %v971, %v1141
        %v1382 = vsel %vm1243, %v972, %v1143
        %v1385 = vsel %vm1243, %v973, %v1145
        %v1388 = vsel %vm1243, %v974, %v1147
        %v1391 = vsel %vm1243, %v975, %v1149
        %v1394 = vsel %vm1243, %v976, %v1151
        %v1397 = vsel %vm1243, %v977, %v1153
        %v1400 = vsel %vm1243, %v978, %v1155
        %v1403 = vsel %vm1243, %v979, %v1157
        %v1406 = vsel %vm1243, %v980, %v1159
        %v1409 = vsel %vm1243, %v981, %v1161
        %v1412 = vsel %vm1243, %v982, %v1163
        %v1415 = vsel %vm1243, %v983, %v1165
        %v1418 = vsel %vm1243, %v984, %v1167
        %v1421 = vsel %vm1243, %v1134, %v1169
        %v1423 = vsel %vm1292, %v1376, %v1174
        %v1425 = vsel %vm1292, %v1379, %v1176
        %v1427 = vsel %vm1292, %v1382, %v1178
        %v1429 = vsel %vm1292, %v1385, %v1180
        %v1431 = vsel %vm1292, %v1388, %v1182
        %v1433 = vsel %vm1292, %v1391, %v1184
        %v1435 = vsel %vm1292, %v1394, %v1186
        %v1437 = vsel %vm1292, %v1397, %v1188
        %v1439 = vsel %vm1292, %v1400, %v1190
        %v1441 = vsel %vm1292, %v1403, %v1192
        %v1443 = vsel %vm1292, %v1406, %v1194
        %v1445 = vsel %vm1292, %v1409, %v1196
        %v1447 = vsel %vm1292, %v1412, %v1198
        %v1449 = vsel %vm1292, %v1415, %v1200
        %v1451 = vsel %vm1292, %v1418, %v1202
        %v1453 = vsel %vm1292, %v1421, %v1204
        %v1455 = vsel %vm1325, %v1423, %v1209
        %v1458 = vsel %vm1325, %v1425, %v1211
        %v1461 = vsel %vm1325, %v1427, %v1213
        %v1464 = vsel %vm1325, %v1429, %v1215
        %v1467 = vsel %vm1325, %v1431, %v1217
        %v1470 = vsel %vm1325, %v1433, %v1219
        %v1473 = vsel %vm1325, %v1435, %v1221
        %v1476 = vsel %vm1325, %v1437, %v1223
        %v1479 = vsel %vm1325, %v1439, %v1225
        %v1482 = vsel %vm1325, %v1441, %v1227
        %v1485 = vsel %vm1325, %v1443, %v1229
        %v1488 = vsel %vm1325, %v1445, %v1231
        %v1491 = vsel %vm1325, %v1447, %v1233
        %v1494 = vsel %vm1325, %v1449, %v1235
        %v1497 = vsel %vm1325, %v1451, %v1237
        %v1500 = vsel %vm1325, %v1453, %v1239
        %v1502 = vld [vmem:[#allocation5] sm:$0xf]
        %v1503 = vld [vmem:[#allocation5 + $0x4] sm:$0xf]
        %v1504 = vld [vmem:[#allocation5 + $0x8] sm:$0xf]
        %v1505 = vld [vmem:[#allocation5 + $0xc] sm:$0xf]
        %v1506 = vld [vmem:[#allocation5 + $0x10] sm:$0xf]
        %v1507 = vld [vmem:[#allocation5 + $0x14] sm:$0xf]
        %v1508 = vld [vmem:[#allocation5 + $0x18] sm:$0xf]
        %v1509 = vld [vmem:[#allocation5 + $0x1c] sm:$0xf]
        %v1510 = vld [vmem:[#allocation5 + $0x20] sm:$0xf]
        %v1511 = vld [vmem:[#allocation5 + $0x24] sm:$0xf]
        %v1512 = vld [vmem:[#allocation5 + $0x28] sm:$0xf]
        %v1513 = vld [vmem:[#allocation5 + $0x2c] sm:$0xf]
        %v1514 = vld [vmem:[#allocation5 + $0x30] sm:$0xf]
        %v1515 = vld [vmem:[#allocation5 + $0x34] sm:$0xf]
        %v1516 = vld [vmem:[#allocation5 + $0x38] sm:$0xf]
        %v1517 = vld [vmem:[#allocation5 + $0x3c] sm:$0xf]
        %v1518 = vld [vmem:[#allocation5 + $0x40] sm:$0xf]
        %v1519 = vld [vmem:[#allocation5 + $0x44] sm:$0xf]
        %v1520 = vld [vmem:[#allocation5 + $0x48] sm:$0xf]
        %v1521 = vld [vmem:[#allocation5 + $0x4c] sm:$0xf]
        %v1522 = vld [vmem:[#allocation5 + $0x50] sm:$0xf]
        %v1523 = vld [vmem:[#allocation5 + $0x54] sm:$0xf]
        %v1524 = vld [vmem:[#allocation5 + $0x58] sm:$0xf]
        %v1525 = vld [vmem:[#allocation5 + $0x5c] sm:$0xf]
        %v1526 = vld [vmem:[#allocation5 + $0x60] sm:$0xf]
        %v1527 = vld [vmem:[#allocation5 + $0x64] sm:$0xf]
        %v1528 = vld [vmem:[#allocation5 + $0x68] sm:$0xf]
        %v1529 = vld [vmem:[#allocation5 + $0x6c] sm:$0xf]
        %v1530 = vld [vmem:[#allocation5 + $0x70] sm:$0xf]
        %v1531 = vld [vmem:[#allocation5 + $0x74] sm:$0xf]
        %v1532 = vld [vmem:[#allocation5 + $0x78] sm:$0xf]
        %v1533 = vld [vmem:[#allocation5 + $0x7c] sm:$0xf]
        %v1534 = vld [vmem:[#allocation5 + $0x80] sm:$0xf]
        %v1535 = vld [vmem:[#allocation5 + $0x84] sm:$0xf]
        %v1536 = vld [vmem:[#allocation5 + $0x88] sm:$0xf]
        %v1537 = vld [vmem:[#allocation5 + $0x8c] sm:$0xf]
        %v1538 = vld [vmem:[#allocation7] sm:$0x1]
        %v1540 = vlaneseq
        %v1541 = vshrl.u32 %v1540, 7
        %v1542 = vsub.s32 0, %v1541
        %v1543 = vrot.slane %v1538, %v1542
        %v1581 = vunpack.c.l.b16 %v1502
        %v1582 = vunpack.c.l.b16 %v1503
        %v1583 = vunpack.c.l.b16 %v1504
        %v1584 = vunpack.c.l.b16 %v1505
        %v1585 = vunpack.c.l.b16 %v1506
        %v1586 = vunpack.c.l.b16 %v1507
        %v1587 = vunpack.c.l.b16 %v1508
        %v1588 = vunpack.c.l.b16 %v1509
        %v1589 = vunpack.c.l.b16 %v1510
        %v1590 = vunpack.c.l.b16 %v1511
        %v1591 = vunpack.c.l.b16 %v1512
        %v1592 = vunpack.c.l.b16 %v1513
        %v1593 = vunpack.c.l.b16 %v1514
        %v1594 = vunpack.c.l.b16 %v1515
        %v1595 = vunpack.c.l.b16 %v1516
        %v1596 = vunpack.c.l.b16 %v1517
        %v1597 = vunpack.c.l.b16 %v1518
        %v1598 = vunpack.c.l.b16 %v1519
        %v1599 = vunpack.c.l.b16 %v1520
        %v1600 = vunpack.c.l.b16 %v1521
        %v1601 = vunpack.c.l.b16 %v1522
        %v1602 = vunpack.c.l.b16 %v1523
        %v1603 = vunpack.c.l.b16 %v1524
        %v1604 = vunpack.c.l.b16 %v1525
        %v1605 = vunpack.c.l.b16 %v1526
        %v1606 = vunpack.c.l.b16 %v1527
        %v1607 = vunpack.c.l.b16 %v1528
        %v1608 = vunpack.c.l.b16 %v1529
        %v1609 = vunpack.c.l.b16 %v1530
        %v1610 = vunpack.c.l.b16 %v1531
        %v1611 = vunpack.c.l.b16 %v1532
        %v1612 = vunpack.c.l.b16 %v1533
        %v1613 = vunpack.c.l.b16 %v1534
        %v1614 = vunpack.c.l.b16 %v1535
        %v1615 = vunpack.c.l.b16 %v1536
        %v1616 = vunpack.c.l.b16 %v1537
        %v1617 = vpack.c.b16 %v1582, %v1581
        %v1618 = vpack.c.b16 %v1584, %v1583
        %v1619 = vpack.c.b16 %v1586, %v1585
        %v1620 = vpack.c.b16 %v1588, %v1587
        %v1621 = vpack.c.b16 %v1590, %v1589
        %v1622 = vpack.c.b16 %v1592, %v1591
        %v1623 = vpack.c.b16 %v1594, %v1593
        %v1624 = vpack.c.b16 %v1596, %v1595
        %v1625 = vpack.c.b16 %v1598, %v1597
        %v1626 = vpack.c.b16 %v1600, %v1599
        %v1627 = vpack.c.b16 %v1602, %v1601
        %v1628 = vpack.c.b16 %v1604, %v1603
        %v1629 = vpack.c.b16 %v1606, %v1605
        %v1630 = vpack.c.b16 %v1608, %v1607
        %v1631 = vpack.c.b16 %v1610, %v1609
        %v1632 = vpack.c.b16 %v1612, %v1611
        %v1633 = vpack.c.b16 %v1614, %v1613
        %v1634 = vpack.c.b16 %v1616, %v1615
        %v1654 = vsel %vm1243, %v1051, 0
        %v1657 = vsel %vm1243, %v1052, 0
        %v1660 = vsel %vm1243, %v1053, 0
        %v1663 = vsel %vm1243, %v1054, 0
        %v1666 = vsel %vm1243, %v1055, 0
        %v1669 = vsel %vm1243, %v1056, 0
        %v1672 = vsel %vm1243, %v1057, 0
        %v1675 = vsel %vm1243, %v1058, 0
        %v1678 = vsel %vm1243, %v1059, 0
        %v1681 = vsel %vm1243, %v1060, 0
        %v1684 = vsel %vm1243, %v1061, 0
        %v1687 = vsel %vm1243, %v1062, 0
        %v1690 = vsel %vm1243, %v1063, 0
        %v1693 = vsel %vm1243, %v1064, 0
        %v1696 = vsel %vm1243, %v1137, 0
        %v1699 = vsel %vm1243, %v1242, 0
        %1701 = vmatprep.subr.bf16.mxu0 0
        %1702 = vmatpush1.bf16.msra.mxu0 %v1617
        %1703 = vmatprep.subr.bf16.mxu0 0
        %1704 = vmatpush1.bf16.msra.mxu0 %v1618
        %1705 = vmatprep.subr.bf16.mxu0 0
        %1706 = vmatpush1.bf16.msra.mxu0 %v1619
        %1707 = vmatprep.subr.bf16.mxu0 0
        %1708 = vmatpush1.bf16.msra.mxu0 %v1620
        %1709 = vmatprep.subr.bf16.mxu0 0
        %1710 = vmatpush1.bf16.msra.mxu0 %v1621
        %1711 = vmatprep.subr.bf16.mxu0 0
        %1712 = vmatpush1.bf16.msra.mxu0 %v1622
        %1713 = vmatprep.subr.bf16.mxu0 0
        %1714 = vmatpush1.bf16.msra.mxu0 %v1623
        %1715 = vmatprep.subr.bf16.mxu0 0
        %1716 = vmatpush1.bf16.msra.mxu0 %v1624
        %1717 = vmatprep.subr.bf16.mxu0 0
        %1718 = vmatpush1.bf16.msra.mxu0 %v1625
        %1719 = vmatprep.subr.bf16.mxu0 0
        %1720 = vmatpush1.bf16.msra.mxu0 %v1626
        %1721 = vmatprep.subr.bf16.mxu0 0
        %1722 = vmatpush1.bf16.msra.mxu0 %v1627
        %1723 = vmatprep.subr.bf16.mxu0 0
        %1724 = vmatpush1.bf16.msra.mxu0 %v1628
        %1725 = vmatprep.subr.bf16.mxu0 0
        %1726 = vmatpush1.bf16.msra.mxu0 %v1629
        %1727 = vmatprep.subr.bf16.mxu0 0
        %1728 = vmatpush1.bf16.msra.mxu0 %v1630
        %1729 = vmatprep.subr.bf16.mxu0 0
        %1730 = vmatpush1.bf16.msra.mxu0 %v1631
        %1731 = vmatprep.subr.bf16.mxu0 0
        %1732 = vmatpush1.bf16.msra.mxu0 %v1632
        %1733 = vmatprep.mubr.bf16.mxu0 %v1455
        %1734 = vmatmul.mubr.bf16.gmra.mrb[0].mxu0 %v1327
        %v1735 = vpop.f32.mrb[0].mxu0
        %v1736 = vadd.f32 %v1543, %v1735
        %v1737 = vpop.f32.mrb[0].mxu0
        %v1738 = vpop.f32.mrb[0].mxu0
        %v1739 = vadd.f32 %v1543, %v1738
        %v1740 = vpop.f32.mrb[0].mxu0
        %1741 = vmatprep.mubr.bf16.mxu0 %v1458
        %1742 = vmatmul.mubr.bf16.gmra.mrb[0].mxu0 %v1330
        %v1743 = vpop.f32.mrb[0].mxu0
        %v1744 = vadd.f32 %v1543, %v1743
        %v1745 = vpop.f32.mrb[0].mxu0
        %v1746 = vpop.f32.mrb[0].mxu0
        %v1747 = vadd.f32 %v1543, %v1746
        %v1748 = vpop.f32.mrb[0].mxu0
        %1749 = vmatprep.mubr.bf16.mxu0 %v1461
        %1750 = vmatmul.mubr.bf16.gmra.mrb[0].mxu0 %v1333
        %v1751 = vpop.f32.mrb[0].mxu0
        %v1752 = vadd.f32 %v1543, %v1751
        %v1753 = vpop.f32.mrb[0].mxu0
        %v1754 = vpop.f32.mrb[0].mxu0
        %v1755 = vadd.f32 %v1543, %v1754
        %v1756 = vpop.f32.mrb[0].mxu0
        %1757 = vmatprep.mubr.bf16.mxu0 %v1464
        %1758 = vmatmul.mubr.bf16.gmra.mrb[0].mxu0 %v1336
        %v1759 = vpop.f32.mrb[0].mxu0
        %v1760 = vadd.f32 %v1543, %v1759
        %v1761 = vpop.f32.mrb[0].mxu0
        %v1762 = vpop.f32.mrb[0].mxu0
        %v1763 = vadd.f32 %v1543, %v1762
        %v1764 = vpop.f32.mrb[0].mxu0
        %1765 = vmatprep.mubr.bf16.mxu0 %v1467
        %1766 = vmatmul.mubr.bf16.gmra.mrb[0].mxu0 %v1339
        %v1767 = vpop.f32.mrb[0].mxu0
        %v1768 = vadd.f32 %v1543, %v1767
        %v1769 = vpop.f32.mrb[0].mxu0
        %v1770 = vpop.f32.mrb[0].mxu0
        %v1771 = vadd.f32 %v1543, %v1770
        %v1772 = vpop.f32.mrb[0].mxu0
        %1773 = vmatprep.mubr.bf16.mxu0 %v1470
        %1774 = vmatmul.mubr.bf16.gmra.mrb[0].mxu0 %v1342
        %v1775 = vpop.f32.mrb[0].mxu0
        %v1776 = vadd.f32 %v1543, %v1775
        %v1777 = vpop.f32.mrb[0].mxu0
        %v1778 = vpop.f32.mrb[0].mxu0
        %v1779 = vadd.f32 %v1543, %v1778
        %v1780 = vpop.f32.mrb[0].mxu0
        %1781 = vmatprep.mubr.bf16.mxu0 %v1473
        %1782 = vmatmul.mubr.bf16.gmra.mrb[0].mxu0 %v1345
        %v1783 = vpop.f32.mrb[0].mxu0
        %v1784 = vadd.f32 %v1543, %v1783
        %v1785 = vpop.f32.mrb[0].mxu0
        %v1786 = vpop.f32.mrb[0].mxu0
        %v1787 = vadd.f32 %v1543, %v1786
        %v1788 = vpop.f32.mrb[0].mxu0
        %1789 = vmatprep.mubr.bf16.mxu0 %v1476
        %1790 = vmatmul.mubr.bf16.gmra.mrb[0].mxu0 %v1348
        %v1791 = vpop.f32.mrb[0].mxu0
        %v1792 = vadd.f32 %v1543, %v1791
        %v1793 = vpop.f32.mrb[0].mxu0
        %v1794 = vpop.f32.mrb[0].mxu0
        %v1795 = vadd.f32 %v1543, %v1794
        %v1796 = vpop.f32.mrb[0].mxu0
        %1797 = vmatprep.mubr.bf16.mxu0 %v1479
        %1798 = vmatmul.mubr.bf16.gmra.mrb[0].mxu0 %v1351
        %v1799 = vpop.f32.mrb[0].mxu0
        %v1800 = vadd.f32 %v1543, %v1799
        %v1801 = vpop.f32.mrb[0].mxu0
        %v1802 = vpop.f32.mrb[0].mxu0
        %v1803 = vadd.f32 %v1543, %v1802
        %v1804 = vpop.f32.mrb[0].mxu0
        %1805 = vmatprep.mubr.bf16.mxu0 %v1482
        %1806 = vmatmul.mubr.bf16.gmra.mrb[0].mxu0 %v1354
        %v1807 = vpop.f32.mrb[0].mxu0
        %v1808 = vadd.f32 %v1543, %v1807
        %v1809 = vpop.f32.mrb[0].mxu0
        %v1810 = vpop.f32.mrb[0].mxu0
        %v1811 = vadd.f32 %v1543, %v1810
        %v1812 = vpop.f32.mrb[0].mxu0
        %1813 = vmatprep.mubr.bf16.mxu0 %v1485
        %1814 = vmatmul.mubr.bf16.gmra.mrb[0].mxu0 %v1357
        %v1815 = vpop.f32.mrb[0].mxu0
        %v1816 = vadd.f32 %v1543, %v1815
        %v1817 = vpop.f32.mrb[0].mxu0
        %v1818 = vpop.f32.mrb[0].mxu0
        %v1819 = vadd.f32 %v1543, %v1818
        %v1820 = vpop.f32.mrb[0].mxu0
        %1821 = vmatprep.mubr.bf16.mxu0 %v1488
        %1822 = vmatmul.mubr.bf16.gmra.mrb[0].mxu0 %v1360
        %v1823 = vpop.f32.mrb[0].mxu0
        %v1824 = vadd.f32 %v1543, %v1823
        %v1825 = vpop.f32.mrb[0].mxu0
        %v1826 = vpop.f32.mrb[0].mxu0
        %v1827 = vadd.f32 %v1543, %v1826
        %v1828 = vpop.f32.mrb[0].mxu0
        %1829 = vmatprep.mubr.bf16.mxu0 %v1491
        %1830 = vmatmul.mubr.bf16.gmra.mrb[0].mxu0 %v1363
        %v1831 = vpop.f32.mrb[0].mxu0
        %v1832 = vadd.f32 %v1543, %v1831
        %v1833 = vpop.f32.mrb[0].mxu0
        %v1834 = vpop.f32.mrb[0].mxu0
        %v1835 = vadd.f32 %v1543, %v1834
        %v1836 = vpop.f32.mrb[0].mxu0
        %1837 = vmatprep.mubr.bf16.mxu0 %v1494
        %1838 = vmatmul.mubr.bf16.gmra.mrb[0].mxu0 %v1366
        %v1839 = vpop.f32.mrb[0].mxu0
        %v1840 = vadd.f32 %v1543, %v1839
        %v1841 = vpop.f32.mrb[0].mxu0
        %v1842 = vpop.f32.mrb[0].mxu0
        %v1843 = vadd.f32 %v1543, %v1842
        %v1844 = vpop.f32.mrb[0].mxu0
        %1845 = vmatprep.mubr.bf16.mxu0 %v1497
        %1846 = vmatmul.mubr.bf16.gmra.mrb[0].mxu0 %v1369
        %v1847 = vpop.f32.mrb[0].mxu0
        %v1848 = vadd.f32 %v1543, %v1847
        %v1849 = vpop.f32.mrb[0].mxu0
        %v1850 = vpop.f32.mrb[0].mxu0
        %v1851 = vadd.f32 %v1543, %v1850
        %v1852 = vpop.f32.mrb[0].mxu0
        %1853 = vmatprep.mubr.bf16.mxu0 %v1500
        %1854 = vmatmul.mubr.bf16.gmra.mrb[0].mxu0 %v1372
        %v1855 = vpop.f32.mrb[0].mxu0
        %v1856 = vadd.f32 %v1543, %v1855
        %v1857 = vpop.f32.mrb[0].mxu0
        %v1858 = vpop.f32.mrb[0].mxu0
        %v1859 = vadd.f32 %v1543, %v1858
        %v1860 = vpop.f32.mrb[0].mxu0
        %1861 = vdwg.mxu0
        %1862 = vmatprep.subr.bf16.mxu0 0
        %1863 = vmatpush1.bf16.msra.mxu0 %v1633
        %1864 = vmatprep.subr.bf16.mxu0 0
        %1865 = vmatpush1.bf16.msra.mxu0 %v1634
        %1866 = vmatprep.subr.bf16.mxu0 0
        %1867 = vmatpush1.bf16.msra.mxu0 0
        %1868 = vmatprep.subr.bf16.mxu0 0
        %1869 = vmatpush1.bf16.msra.mxu0 0
        %1870 = vmatprep.subr.bf16.mxu0 0
        %1871 = vmatpush1.bf16.msra.mxu0 0
        %1872 = vmatprep.subr.bf16.mxu0 0
        %1873 = vmatpush1.bf16.msra.mxu0 0
        %1874 = vmatprep.subr.bf16.mxu0 0
        %1875 = vmatpush1.bf16.msra.mxu0 0
        %1876 = vmatprep.subr.bf16.mxu0 0
        %1877 = vmatpush1.bf16.msra.mxu0 0
        %1878 = vmatprep.subr.bf16.mxu0 0
        %1879 = vmatpush1.bf16.msra.mxu0 0
        %1880 = vmatprep.subr.bf16.mxu0 0
        %1881 = vmatpush1.bf16.msra.mxu0 0
        %1882 = vmatprep.subr.bf16.mxu0 0
        %1883 = vmatpush1.bf16.msra.mxu0 0
        %1884 = vmatprep.subr.bf16.mxu0 0
        %1885 = vmatpush1.bf16.msra.mxu0 0
        %1886 = vmatprep.subr.bf16.mxu0 0
        %1887 = vmatpush1.bf16.msra.mxu0 0
        %1888 = vmatprep.subr.bf16.mxu0 0
        %1889 = vmatpush1.bf16.msra.mxu0 0
        %1890 = vmatprep.subr.bf16.mxu0 0
        %1891 = vmatpush1.bf16.msra.mxu0 0
        %1892 = vmatprep.subr.bf16.mxu0 0
        %1893 = vmatpush1.bf16.msra.mxu0 0
        %1894 = vmatprep.mubr.bf16.mxu0 0
        %1895 = vmatmul.mubr.bf16.gmra.mrb[0].mxu0 %v1654
        %v1896 = vpop.f32.mrb[0].mxu0
        %v1897 = vadd.f32 %v1736, %v1896
        %v1898 = vpop.f32.mrb[0].mxu0
        %v1899 = vpop.f32.mrb[0].mxu0
        %v1900 = vadd.f32 %v1739, %v1899
        %v1901 = vpop.f32.mrb[0].mxu0
        %1902 = vmatprep.mubr.bf16.mxu0 0
        %1903 = vmatmul.mubr.bf16.gmra.mrb[0].mxu0 %v1657
        %v1904 = vpop.f32.mrb[0].mxu0
        %v1905 = vadd.f32 %v1744, %v1904
        %v1906 = vpop.f32.mrb[0].mxu0
        %v1907 = vpop.f32.mrb[0].mxu0
        %v1908 = vadd.f32 %v1747, %v1907
        %v1909 = vpop.f32.mrb[0].mxu0
        %1910 = vmatprep.mubr.bf16.mxu0 0
        %1911 = vmatmul.mubr.bf16.gmra.mrb[0].mxu0 %v1660
        %v1912 = vpop.f32.mrb[0].mxu0
        %v1913 = vadd.f32 %v1752, %v1912
        %v1914 = vpop.f32.mrb[0].mxu0
        %v1915 = vpop.f32.mrb[0].mxu0
        %v1916 = vadd.f32 %v1755, %v1915
        %v1917 = vpop.f32.mrb[0].mxu0
        %1918 = vmatprep.mubr.bf16.mxu0 0
        %1919 = vmatmul.mubr.bf16.gmra.mrb[0].mxu0 %v1663
        %v1920 = vpop.f32.mrb[0].mxu0
        %v1921 = vadd.f32 %v1760, %v1920
        %v1922 = vpop.f32.mrb[0].mxu0
        %v1923 = vpop.f32.mrb[0].mxu0
        %v1924 = vadd.f32 %v1763, %v1923
        %v1925 = vpop.f32.mrb[0].mxu0
        %1926 = vmatprep.mubr.bf16.mxu0 0
        %1927 = vmatmul.mubr.bf16.gmra.mrb[0].mxu0 %v1666
        %v1928 = vpop.f32.mrb[0].mxu0
        %v1929 = vadd.f32 %v1768, %v1928
        %v1930 = vpop.f32.mrb[0].mxu0
        %v1931 = vpop.f32.mrb[0].mxu0
        %v1932 = vadd.f32 %v1771, %v1931
        %v1933 = vpop.f32.mrb[0].mxu0
        %1934 = vmatprep.mubr.bf16.mxu0 0
        %1935 = vmatmul.mubr.bf16.gmra.mrb[0].mxu0 %v1669
        %v1936 = vpop.f32.mrb[0].mxu0
        %v1937 = vadd.f32 %v1776, %v1936
        %v1938 = vpop.f32.mrb[0].mxu0
        %v1939 = vpop.f32.mrb[0].mxu0
        %v1940 = vadd.f32 %v1779, %v1939
        %v1941 = vpop.f32.mrb[0].mxu0
        %1942 = vmatprep.mubr.bf16.mxu0 0
        %1943 = vmatmul.mubr.bf16.gmra.mrb[0].mxu0 %v1672
        %v1944 = vpop.f32.mrb[0].mxu0
        %v1945 = vadd.f32 %v1784, %v1944
        %v1946 = vpop.f32.mrb[0].mxu0
        %v1947 = vpop.f32.mrb[0].mxu0
        %v1948 = vadd.f32 %v1787, %v1947
        %v1949 = vpop.f32.mrb[0].mxu0
        %1950 = vmatprep.mubr.bf16.mxu0 0
        %1951 = vmatmul.mubr.bf16.gmra.mrb[0].mxu0 %v1675
        %v1952 = vpop.f32.mrb[0].mxu0
        %v1953 = vadd.f32 %v1792, %v1952
        %v1954 = vpop.f32.mrb[0].mxu0
        %v1955 = vpop.f32.mrb[0].mxu0
        %v1956 = vadd.f32 %v1795, %v1955
        %v1957 = vpop.f32.mrb[0].mxu0
        %1958 = vmatprep.mubr.bf16.mxu0 0
        %1959 = vmatmul.mubr.bf16.gmra.mrb[0].mxu0 %v1678
        %v1960 = vpop.f32.mrb[0].mxu0
        %v1961 = vadd.f32 %v1800, %v1960
        %v1962 = vpop.f32.mrb[0].mxu0
        %v1963 = vpop.f32.mrb[0].mxu0
        %v1964 = vadd.f32 %v1803, %v1963
        %v1965 = vpop.f32.mrb[0].mxu0
        %1966 = vmatprep.mubr.bf16.mxu0 0
        %1967 = vmatmul.mubr.bf16.gmra.mrb[0].mxu0 %v1681
        %v1968 = vpop.f32.mrb[0].mxu0
        %v1969 = vadd.f32 %v1808, %v1968
        %v1970 = vpop.f32.mrb[0].mxu0
        %v1971 = vpop.f32.mrb[0].mxu0
        %v1972 = vadd.f32 %v1811, %v1971
        %v1973 = vpop.f32.mrb[0].mxu0
        %1974 = vmatprep.mubr.bf16.mxu0 0
        %1975 = vmatmul.mubr.bf16.gmra.mrb[0].mxu0 %v1684
        %v1976 = vpop.f32.mrb[0].mxu0
        %v1977 = vadd.f32 %v1816, %v1976
        %v1978 = vpop.f32.mrb[0].mxu0
        %v1979 = vpop.f32.mrb[0].mxu0
        %v1980 = vadd.f32 %v1819, %v1979
        %v1981 = vpop.f32.mrb[0].mxu0
        %1982 = vmatprep.mubr.bf16.mxu0 0
        %1983 = vmatmul.mubr.bf16.gmra.mrb[0].mxu0 %v1687
        %v1984 = vpop.f32.mrb[0].mxu0
        %v1985 = vadd.f32 %v1824, %v1984
        %v1986 = vpop.f32.mrb[0].mxu0
        %v1987 = vpop.f32.mrb[0].mxu0
        %v1988 = vadd.f32 %v1827, %v1987
        %v1989 = vpop.f32.mrb[0].mxu0
        %1990 = vmatprep.mubr.bf16.mxu0 0
        %1991 = vmatmul.mubr.bf16.gmra.mrb[0].mxu0 %v1690
        %v1992 = vpop.f32.mrb[0].mxu0
        %v1993 = vadd.f32 %v1832, %v1992
        %v1994 = vpop.f32.mrb[0].mxu0
        %v1995 = vpop.f32.mrb[0].mxu0
        %v1996 = vadd.f32 %v1835, %v1995
        %v1997 = vpop.f32.mrb[0].mxu0
        %1998 = vmatprep.mubr.bf16.mxu0 0
        %1999 = vmatmul.mubr.bf16.gmra.mrb[0].mxu0 %v1693
        %v2000 = vpop.f32.mrb[0].mxu0
        %v2001 = vadd.f32 %v1840, %v2000
        %v2002 = vpop.f32.mrb[0].mxu0
        %v2003 = vpop.f32.mrb[0].mxu0
        %v2004 = vadd.f32 %v1843, %v2003
        %v2005 = vpop.f32.mrb[0].mxu0
        %2006 = vmatprep.mubr.bf16.mxu0 0
        %2007 = vmatmul.mubr.bf16.gmra.mrb[0].mxu0 %v1696
        %v2008 = vpop.f32.mrb[0].mxu0
        %v2009 = vadd.f32 %v1848, %v2008
        %v2010 = vpop.f32.mrb[0].mxu0
        %v2011 = vpop.f32.mrb[0].mxu0
        %v2012 = vadd.f32 %v1851, %v2011
        %v2013 = vpop.f32.mrb[0].mxu0
        %2014 = vmatprep.mubr.bf16.mxu0 0
        %2015 = vmatmul.mubr.bf16.gmra.mrb[0].mxu0 %v1699
        %v2016 = vpop.f32.mrb[0].mxu0
        %v2017 = vadd.f32 %v1856, %v2016
        %v2018 = vpop.f32.mrb[0].mxu0
        %v2019 = vpop.f32.mrb[0].mxu0
        %v2020 = vadd.f32 %v1859, %v2019
        %v2021 = vpop.f32.mrb[0].mxu0
        %2022 = vdwg.mxu0
        %2023 = vst.msk [vmem:[%s215] sm:$0xff] %vm1243, %v1897
        %2024 = vst.msk [vmem:[%s215 + $0x8] sm:$0xff] %vm1243, %v1900
        %2025 = vst.msk [vmem:[%s215 + $0x10] sm:$0xff] %vm1243, %v1905
        %2026 = vst.msk [vmem:[%s215 + $0x18] sm:$0xff] %vm1243, %v1908
        %2027 = vst.msk [vmem:[%s215 + $0x20] sm:$0xff] %vm1243, %v1913
        %2028 = vst.msk [vmem:[%s215 + $0x28] sm:$0xff] %vm1243, %v1916
        %2029 = vst.msk [vmem:[%s215 + $0x30] sm:$0xff] %vm1243, %v1921
        %2030 = vst.msk [vmem:[%s215 + $0x38] sm:$0xff] %vm1243, %v1924
        %2031 = vst.msk [vmem:[%s215 + $0x40] sm:$0xff] %vm1243, %v1929
        %2032 = vst.msk [vmem:[%s215 + $0x48] sm:$0xff] %vm1243, %v1932
        %2033 = vst.msk [vmem:[%s215 + $0x50] sm:$0xff] %vm1243, %v1937
        %2034 = vst.msk [vmem:[%s215 + $0x58] sm:$0xff] %vm1243, %v1940
        %2035 = vst.msk [vmem:[%s215 + $0x60] sm:$0xff] %vm1243, %v1945
        %2036 = vst.msk [vmem:[%s215 + $0x68] sm:$0xff] %vm1243, %v1948
        %2037 = vst.msk [vmem:[%s215 + $0x70] sm:$0xff] %vm1243, %v1953
        %2038 = vst.msk [vmem:[%s215 + $0x78] sm:$0xff] %vm1243, %v1956
        %2039 = vst.msk [vmem:[%s215 + $0x80] sm:$0xff] %vm1243, %v1961
        %2040 = vst.msk [vmem:[%s215 + $0x88] sm:$0xff] %vm1243, %v1964
        %2041 = vst.msk [vmem:[%s215 + $0x90] sm:$0xff] %vm1243, %v1969
        %2042 = vst.msk [vmem:[%s215 + $0x98] sm:$0xff] %vm1243, %v1972
        %2043 = vst.msk [vmem:[%s215 + $0xa0] sm:$0xff] %vm1243, %v1977
        %2044 = vst.msk [vmem:[%s215 + $0xa8] sm:$0xff] %vm1243, %v1980
        %2045 = vst.msk [vmem:[%s215 + $0xb0] sm:$0xff] %vm1243, %v1985
        %2046 = vst.msk [vmem:[%s215 + $0xb8] sm:$0xff] %vm1243, %v1988
        %2047 = vst.msk [vmem:[%s215 + $0xc0] sm:$0xff] %vm1243, %v1993
        %2048 = vst.msk [vmem:[%s215 + $0xc8] sm:$0xff] %vm1243, %v1996
        %2049 = vst.msk [vmem:[%s215 + $0xd0] sm:$0xff] %vm1243, %v2001
        %2050 = vst.msk [vmem:[%s215 + $0xd8] sm:$0xff] %vm1243, %v2004
        %2051 = vst.msk [vmem:[%s215 + $0xe0] sm:$0xff] %vm1243, %v2009
        %2052 = vst.msk [vmem:[%s215 + $0xe8] sm:$0xff] %vm1243, %v2012
        %2053 = vst.msk [vmem:[%s215 + $0xf0] sm:$0xff] %vm1243, %v2017
        %2054 = vst.msk [vmem:[%s215 + $0xf8] sm:$0xff] %vm1243, %v2020
        %s2055 = sand.u32 %s97, 1
        %s2056 = scalar_lea.sflag [#allocation4], %s2055
        %s2057 = sand.u32 %s97, 1
        %s2058 = smul.addr %s2057, 256
        %s2059 = scalar_lea.vmem [#allocation8], %s2058
        // Predicated region
        $region45: #{tpu_custom_call.1} parent=31 // pred_check
          %p2060 = pneg %p107
        $region46: #{tpu_custom_call.1} parent=31 // pred_check_branch
          %2062 = sbr.rel (%p2060) target = $region48
        $region47: #{tpu_custom_call.1} parent=31 // pred_region
          %s2064 = ssub.s32 4096, 4096
          %2065 = vsyncadd %s2056, %s2064
          %s2066 = smul.addr %s21, 32
          %s2067 = smul.addr %s2066, 128
          %s2068 = scalar_lea.hbm %s3, %s2067
          %s2069 = sshll.u32 %s2059, 4
          %s2070 = int_to_ptr.vmem [resolvable:$true] %s2069
          %2075 = dma.vmem_to_hbm [thread:$0]  %s2070, 4096, %s2068, %s2056, 128, 128, 8
        $region48: #{tpu_custom_call.1} parent=31 // pred_fallthru
          _
      $region32: #{tpu_custom_call.1} parent=5 // pred_fallthru
        _
      %p2076 = scmp.le.s32.totalorder 2, %s16
      // Predicated region
      $region49: #{tpu_custom_call.1} parent=5 // pred_check
        %p2077 = pneg %p2076
      $region50: #{tpu_custom_call.1} parent=5 // pred_check_branch
        %2079 = sbr.rel (%p2077) target = $region52
      $region51: #{tpu_custom_call.1} parent=5 // pred_region
        %s2080 = ssub.s32 %s16, 2
        // Predicated region
        $region53: #{tpu_custom_call.1} parent=51 // pred_check
          %p2081 = pneg %p113
        $region54: #{tpu_custom_call.1} parent=51 // pred_check_branch
          %2083 = sbr.rel (%p2081) target = $region56
        $region55: #{tpu_custom_call.1} parent=51 // pred_region
          %s2084 = sand.u32 %s98, 1
          %s2085 = scalar_lea.sflag [#allocation4], %s2084
          %s2086 = sand.u32 %s98, 1
          %s2087 = smul.addr %s2086, 256
          %s2088 = scalar_lea.vmem [#allocation8], %s2087
          %2089 = dma.done %s2085, 4096
        $region56: #{tpu_custom_call.1} parent=51 // pred_fallthru
          _
      $region52: #{tpu_custom_call.1} parent=5 // pred_fallthru
        _
    $region6: #{tpu_custom_call.1} parent=1 // loop_footer
      %s20 = sadd.s32 1, %s16
    $region7: #{tpu_custom_call.1} parent=1 // loop_footer_branch
      %15 = sbr.rel target = $region3
    $region8: #{tpu_custom_call.1} parent=1 // loop_exit
      _
    %2090 = vsyncpa [#allocation3], 1
    %s2091 = scalar_lea.sflag [#allocation3], 1
    %2092 = vsyncpa %s2091, 1
    %2093 = vsyncpa [#allocation6], 1
    %2094 = vsyncpa [#allocation4], 1
    %s2095 = scalar_lea.sflag [#allocation4], 1
    %2096 = vsyncpa %s2095, 1

</llo_original>
